<compile_context>
chip_gen: v7x
topology: tpu7x:2x2x1
jax: 0.10.0
libtpu: 0.0.40
codegen_flags: <defaults>
</compile_context>

<pallas_src>
import functools

import jax
import jax.numpy as jnp
import numpy as np
from jax import lax
from jax.experimental import pallas as pl
from jax.experimental.pallas import tpu as pltpu


def _lstm_chunk_kernel(lens_ref, x_ref, wih_ref, whh_ref, b_ref,
                       seq_ref, last_ref, h_ref, c_ref, gx_ref, *, unroll):
    """One time-chunk of the LSTM.

    lens_ref : (B, 1)      i32  per-row valid length                       (VMEM, resident)
    x_ref    : (Tc*B, D)   bf16 time-major input rows of this chunk        (VMEM, streamed in)
    wih_ref  : (D, 4H)     bf16 input weights (transposed), resident
    whh_ref  : (H, 4H)     bf16 recurrent weights (transposed), resident
    b_ref    : (1, 4H)     f32  b_ih + b_hh, resident
    seq_ref  : (Tc, B, H)  f32  per-step hidden outputs (zero on padding)  (streamed out)
    last_ref : (B, H)      f32  h_n (state at each row's last valid step)  (resident out)
    h_ref,c_ref : (B, H)   f32  carried state (VMEM scratch, persists across the grid)
    gx_ref   : (Tc*B, 4H)  f32  chunk pre-activation scratch
    """
    tc = pl.program_id(0)
    Tc, B, H = seq_ref.shape

    @pl.when(tc == 0)
    def _():
        h_ref[...] = jnp.zeros_like(h_ref)
        c_ref[...] = jnp.zeros_like(c_ref)

    # Fused input projection for the whole chunk: one lane-dense bf16 MXU matmul with f32
    # accumulation (throughput work, off the serial critical path).
    gx_ref[...] = jnp.dot(x_ref[...], wih_ref[...],
                          preferred_element_type=jnp.float32) + b_ref[...]

    whh = whh_ref[...]          # resident bf16 recurrent weights, hoisted out of the loop
    lens = lens_ref[...]        # (B, 1) int32, loaded once
    t0 = tc * Tc

    def step(t, carry):
        h_prev, c_prev = carry

        # Only this small recurrent matmul remains on the serial dependency chain.
        row = pl.multiple_of(t * B, B)
        gates = gx_ref[pl.ds(row, B), :] + jnp.dot(
            h_prev.astype(jnp.bfloat16), whh,
            preferred_element_type=jnp.float32)                      # (B, 4H) f32

        # Whole-vreg EUP passes, then static lane slices (PyTorch gate order [i, f, g, o]).
        sig = jax.nn.sigmoid(gates)
        tnh = jnp.tanh(gates)
        i_g = sig[:, 0:H]
        f_g = sig[:, H:2 * H]
        g_g = tnh[:, 2 * H:3 * H]
        o_g = sig[:, 3 * H:4 * H]

        c_new = f_g * c_prev + i_g * g_g
        h_new = o_g * jnp.tanh(c_new)

        # Packed-sequence semantics: padded steps carry state, emit zeros.
        valid = (t0 + t) < lens                                      # (B, 1) bool
        c_nxt = jnp.where(valid, c_new, c_prev)
        h_nxt = jnp.where(valid, h_new, h_prev)
        seq_ref[t] = jnp.where(valid, h_new, 0.0).astype(seq_ref.dtype)
        return h_nxt, c_nxt

    h_fin, c_fin = lax.fori_loop(0, Tc, step, (h_ref[...], c_ref[...]),
                                 unroll=unroll)
    h_ref[...] = h_fin
    c_ref[...] = c_fin
    last_ref[...] = h_fin.astype(last_ref.dtype)


def lstm_pallas(inputs, mask, w_ih, w_hh, b_ih, b_hh, *, t_chunk=8, unroll=8):
    """inputs: (B, T, D) float; mask: (B, T) bool or None.

    Returns (outputs (B, T, H) f32, last_state h_n (B, H) f32)."""
    B, T, D = inputs.shape
    H = w_hh.shape[1]
    G = 4 * H
    assert w_ih.shape == (G, D) and w_hh.shape == (G, H)
    assert t_chunk % 8 == 0

    n_chunks = pl.cdiv(T, t_chunk)
    t_pad = n_chunks * t_chunk
    unroll = min(unroll, t_chunk)

    # Time-major, zero-padded along T, flattened to 2-D rows (row = t * B + b), bf16 for the MXU.
    x_tm = jnp.transpose(inputs, (1, 0, 2))
    if t_pad != T:
        x_tm = jnp.pad(x_tm, ((0, t_pad - T), (0, 0), (0, 0)))
    x_rows = x_tm.reshape(t_pad * B, D).astype(jnp.bfloat16)

    # The PyTorch module derives per-row lengths from the mask (pack_padded_sequence), i.e. the
    # mask is a validity prefix; the kernel consumes lengths directly (one compare per step).
    if mask is None:
        lengths = jnp.full((B, 1), T, jnp.int32)
    else:
        lengths = jnp.sum(mask.astype(jnp.int32), axis=1, keepdims=True)

    wih_t = jnp.asarray(w_ih).astype(jnp.bfloat16).T                         # (D, 4H)
    whh_t = jnp.asarray(w_hh).astype(jnp.bfloat16).T                         # (H, 4H)
    bias = (jnp.asarray(b_ih, jnp.float32)
            + jnp.asarray(b_hh, jnp.float32)).reshape(1, G)                  # (1, 4H)

    kernel = functools.partial(_lstm_chunk_kernel, unroll=unroll)

    seq_tm, last_h = pl.pallas_call(
        kernel,
        out_shape=(jax.ShapeDtypeStruct((t_pad, B, H), jnp.float32),
                   jax.ShapeDtypeStruct((B, H), jnp.float32)),
        grid_spec=pltpu.PrefetchScalarGridSpec(
            num_scalar_prefetch=0,
            grid=(n_chunks,),
            in_specs=[
                pl.BlockSpec((B, 1), lambda c: (0, 0)),                 # lengths   (resident)
                pl.BlockSpec((t_chunk * B, D), lambda c: (c, 0)),       # X rows    (streamed)
                pl.BlockSpec((D, G), lambda c: (0, 0)),                 # W_ih^T    (resident)
                pl.BlockSpec((H, G), lambda c: (0, 0)),                 # W_hh^T    (resident)
                pl.BlockSpec((1, G), lambda c: (0, 0)),                 # bias      (resident)
            ],
            out_specs=(
                pl.BlockSpec((t_chunk, B, H), lambda c: (c, 0, 0)),     # per-step outputs
                pl.BlockSpec((B, H), lambda c: (0, 0)),                 # h_n       (resident)
            ),
            scratch_shapes=[
                pltpu.VMEM((B, H), jnp.float32),                        # h carry
                pltpu.VMEM((B, H), jnp.float32),                        # c carry
                pltpu.VMEM((t_chunk * B, G), jnp.float32),              # chunk pre-activations
            ]),
        compiler_params=pltpu.CompilerParams(
            dimension_semantics=("arbitrary",)),    # state carries across T chunks
    )(lengths, x_rows, wih_t, whh_t, bias)

    outputs = jnp.transpose(seq_tm[:T], (1, 0, 2))                      # (B, T, H)
    return outputs, last_h


def rnn_base_encoder_forward(inputs, mask, params, return_sequences):
    """JAX/Pallas equivalent of _RNNBaseEncoder.forward (LSTM module, hidden_state=None)."""
    outputs, last_h = lstm_pallas(inputs, mask,
                                  params["w_ih"], params["w_hh"],
                                  params["b_ih"], params["b_hh"])
    if return_sequences:
        return outputs
    # mask is None: outputs[:, -1, :] == h at step T-1 == last_h (all steps valid).
    # mask given  : h_n at each row's last valid step == last_h.
    return last_h


# ---------------------------- pure-JAX f32 reference ----------------------------
def _lstm_ref(inputs, mask, w_ih, w_hh, b_ih, b_hh):
    B, T, D = inputs.shape
    H = w_hh.shape[1]
    w_ih = jnp.asarray(w_ih, jnp.float32)
    w_hh = jnp.asarray(w_hh, jnp.float32)
    b = jnp.asarray(b_ih, jnp.float32) + jnp.asarray(b_hh, jnp.float32)
    if mask is None:
        m_all = jnp.ones((T, B, 1), jnp.float32)
    else:
        m_all = jnp.transpose(mask.astype(jnp.float32), (1, 0))[:, :, None]
    x_all = jnp.transpose(inputs.astype(jnp.float32), (1, 0, 2))

    def step(carry, xm):
        h, c = carry
        x, m = xm
        gates = x @ w_ih.T + h @ w_hh.T + b
        i = jax.nn.sigmoid(gates[:, 0:H])
        f = jax.nn.sigmoid(gates[:, H:2 * H])
        g = jnp.tanh(gates[:, 2 * H:3 * H])
        o = jax.nn.sigmoid(gates[:, 3 * H:4 * H])
        c_new = f * c + i * g
        h_new = o * jnp.tanh(c_new)
        c2 = m * c_new + (1.0 - m) * c
        h2 = m * h_new + (1.0 - m) * h
        return (h2, c2), m * h_new

    (h_fin, _), outs = jax.lax.scan(
        step, (jnp.zeros((B, H), jnp.float32), jnp.zeros((B, H), jnp.float32)),
        (x_all, m_all))
    return jnp.transpose(outs, (1, 0, 2)), h_fin


# --------------------------------- driver -----------------------------------
if __name__ == "__main__":
    B, T, D, H = 8, 10, 16, 32

    key = jax.random.PRNGKey(0)
    k_x, k1, k2, k3, k4 = jax.random.split(key, 5)

    bound = 1.0 / np.sqrt(H)  # PyTorch default LSTM init: U(-1/sqrt(H), 1/sqrt(H))
    params = {
        "w_ih": jax.random.uniform(k1, (4 * H, D), jnp.float32, -bound, bound),
        "w_hh": jax.random.uniform(k2, (4 * H, H), jnp.float32, -bound, bound),
        "b_ih": jax.random.uniform(k3, (4 * H,), jnp.float32, -bound, bound),
        "b_hh": jax.random.uniform(k4, (4 * H,), jnp.float32, -bound, bound),
    }

    inputs = jax.random.normal(k_x, (B, T, D), jnp.float32)
    lengths = jnp.array([10, 7, 3, 10, 1, 5, 8, 2], jnp.int32)
    mask = (jnp.arange(T)[None, :] < lengths[:, None])            # (B, T) bool prefix mask

    fwd = jax.jit(rnn_base_encoder_forward, static_argnames=("return_sequences",))

    # with mask
    out_seq = jax.block_until_ready(fwd(inputs, mask, params, return_sequences=True))
    out_last = jax.block_until_ready(fwd(inputs, mask, params, return_sequences=False))
    # without mask
    out_nomask_seq = jax.block_until_ready(fwd(inputs, None, params, return_sequences=True))
    out_nomask_last = jax.block_until_ready(fwd(inputs, None, params, return_sequences=False))

    assert out_seq.shape == (B, T, H) and out_last.shape == (B, H)
    assert out_nomask_seq.shape == (B, T, H) and out_nomask_last.shape == (B, H)

    # --- loose numerical check vs f32 reference (kernel uses bf16 operands, f32 accumulation) ---
    ref_seq, ref_last = _lstm_ref(inputs, mask, **params)
    ref_seq_nm, _ = _lstm_ref(inputs, None, **params)
    tol = dict(atol=4e-2, rtol=4e-2)
    np.testing.assert_allclose(np.asarray(out_seq), np.asarray(ref_seq), **tol)
    np.testing.assert_allclose(np.asarray(out_last), np.asarray(ref_last), **tol)
    np.testing.assert_allclose(np.asarray(out_nomask_seq), np.asarray(ref_seq_nm), **tol)
    np.testing.assert_allclose(np.asarray(out_nomask_last), np.asarray(ref_seq_nm[:, -1, :]), **tol)

    # --- bit-exact structural checks of the packed-sequence / last-state semantics ---
    lengths_np = np.asarray(lengths)
    out_seq_np = np.asarray(out_seq)
    out_last_np = np.asarray(out_last)
    nm_seq_np = np.asarray(out_nomask_seq)
    nm_last_np = np.asarray(out_nomask_last)

    # 1. padded steps emit exact zeros
    for b in range(B):
        assert np.all(out_seq_np[b, lengths_np[b]:, :] == 0.0)
    # 2. h_n equals the sequence output at each row's last valid step
    gathered = np.stack([out_seq_np[b, lengths_np[b] - 1, :] for b in range(B)])
    np.testing.assert_array_equal(out_last_np, gathered)
    # 3. full-length rows give identical results with and without the mask
    full_rows = np.where(lengths_np == T)[0]
    np.testing.assert_array_equal(out_seq_np[full_rows], nm_seq_np[full_rows])
    # 4. no-mask final state equals the last sequence step
    np.testing.assert_array_equal(nm_last_np, nm_seq_np[:, -1, :])

    print("KERNEL_OK")
</pallas_src>

<mosaic_0001>
module attributes {stable_mosaic.version = 11 : i64} {
  func.func @_lstm_chunk_kernel(%arg0: i32, %arg1: memref<8x1xi32, #tpu.memory_space<vmem>>, %arg2: memref<64x16xbf16, #tpu.memory_space<vmem>>, %arg3: memref<16x128xbf16, #tpu.memory_space<vmem>>, %arg4: memref<32x128xbf16, #tpu.memory_space<vmem>>, %arg5: memref<1x128xf32, #tpu.memory_space<vmem>>, %arg6: memref<8x8x32xf32, #tpu.memory_space<vmem>>, %arg7: memref<8x32xf32, #tpu.memory_space<vmem>>, %arg8: memref<8x32xf32, #tpu.memory_space<vmem>>, %arg9: memref<8x32xf32, #tpu.memory_space<vmem>>, %arg10: memref<64x128xf32, #tpu.memory_space<vmem>>) attributes {dimension_semantics = [#tpu.dimension_semantics<arbitrary>], iteration_bounds = array<i64: 2>, scalar_prefetch = 0 : i64, scratch_operands = 3 : i64, tpu.core_type = #tpu.core_type<tc>, window_params = [{pipeline_mode = #tpu.pipeline_mode<synchronous>, transform_indices = @transform_0, window_bounds = array<i64: 8, 1>}, {transform_indices = @transform_1, window_bounds = array<i64: 64, 16>}, {pipeline_mode = #tpu.pipeline_mode<synchronous>, transform_indices = @transform_2, window_bounds = array<i64: 16, 128>}, {pipeline_mode = #tpu.pipeline_mode<synchronous>, transform_indices = @transform_3, window_bounds = array<i64: 32, 128>}, {pipeline_mode = #tpu.pipeline_mode<synchronous>, transform_indices = @transform_4, window_bounds = array<i64: 1, 128>}, {transform_indices = @transform_5, window_bounds = array<i64: 8, 8, 32>}, {pipeline_mode = #tpu.pipeline_mode<synchronous>, transform_indices = @transform_6, window_bounds = array<i64: 8, 32>}]} {
    %c0_i32 = arith.constant 0 : i32
    %0 = arith.cmpi eq, %arg0, %c0_i32 : i32
    %1 = arith.extui %0 : i1 to i32
    %c0_i32_0 = arith.constant 0 : i32
    %2 = arith.cmpi ne, %1, %c0_i32_0 : i32
    scf.if %2 {
      %cst_80 = arith.constant 0.000000e+00 : f32
      %330 = vector.broadcast %cst_80 : f32 to vector<8x32xf32>
      %c0_81 = arith.constant 0 : index
      %c0_82 = arith.constant 0 : index
      %331 = vector.load %arg8[%c0_81, %c0_82] : memref<8x32xf32, #tpu.memory_space<vmem>>, vector<8x32xf32>
      tpu.vector_store %arg8[%c0_81, %c0_82], %330 {strides = array<i32>} : memref<8x32xf32, #tpu.memory_space<vmem>>, vector<8x32xf32>,
      %cst_83 = arith.constant 0.000000e+00 : f32
      %332 = vector.broadcast %cst_83 : f32 to vector<8x32xf32>
      %c0_84 = arith.constant 0 : index
      %c0_85 = arith.constant 0 : index
      %333 = vector.load %arg9[%c0_84, %c0_85] : memref<8x32xf32, #tpu.memory_space<vmem>>, vector<8x32xf32>
      tpu.vector_store %arg9[%c0_84, %c0_85], %332 {strides = array<i32>} : memref<8x32xf32, #tpu.memory_space<vmem>>, vector<8x32xf32>,
    } else {
    }
    %c0 = arith.constant 0 : index
    %c0_1 = arith.constant 0 : index
    %3 = vector.load %arg2[%c0, %c0_1] : memref<64x16xbf16, #tpu.memory_space<vmem>>, vector<64x16xbf16>
    %c0_2 = arith.constant 0 : index
    %c0_3 = arith.constant 0 : index
    %4 = vector.load %arg3[%c0_2, %c0_3] : memref<16x128xbf16, #tpu.memory_space<vmem>>, vector<16x128xbf16>
    %cst = arith.constant dense<0.000000e+00> : vector<64x128xf32>
    %5 = tpu.matmul %3, %4, %cst {dimension_numbers = #tpu.dot_dimension_numbers<[1], [0], [0], [1], [0, 0, 1, 1], [], []>} : vector<64x16xbf16>, vector<16x128xbf16>, vector<64x128xf32> -> vector<64x128xf32>
    %c0_4 = arith.constant 0 : index
    %c0_5 = arith.constant 0 : index
    %6 = vector.load %arg5[%c0_4, %c0_5] : memref<1x128xf32, #tpu.memory_space<vmem>>, vector<1x128xf32>
    %7 = vector.broadcast %6 : vector<1x128xf32> to vector<64x128xf32>
    %8 = arith.addf %5, %7 : vector<64x128xf32>
    %c0_6 = arith.constant 0 : index
    %c0_7 = arith.constant 0 : index
    %9 = vector.load %arg10[%c0_6, %c0_7] : memref<64x128xf32, #tpu.memory_space<vmem>>, vector<64x128xf32>
    tpu.vector_store %arg10[%c0_6, %c0_7], %8 {strides = array<i32>} : memref<64x128xf32, #tpu.memory_space<vmem>>, vector<64x128xf32>,
    %c0_8 = arith.constant 0 : index
    %c0_9 = arith.constant 0 : index
    %10 = vector.load %arg4[%c0_8, %c0_9] : memref<32x128xbf16, #tpu.memory_space<vmem>>, vector<32x128xbf16>
    %c0_10 = arith.constant 0 : index
    %c0_11 = arith.constant 0 : index
    %11 = vector.load %arg1[%c0_10, %c0_11] : memref<8x1xi32, #tpu.memory_space<vmem>>, vector<8x1xi32>
    %c8_i32 = arith.constant 8 : i32
    %12 = arith.muli %arg0, %c8_i32 : i32
    %c0_12 = arith.constant 0 : index
    %c0_13 = arith.constant 0 : index
    %13 = vector.load %arg8[%c0_12, %c0_13] : memref<8x32xf32, #tpu.memory_space<vmem>>, vector<8x32xf32>
    %c0_14 = arith.constant 0 : index
    %c0_15 = arith.constant 0 : index
    %14 = vector.load %arg9[%c0_14, %c0_15] : memref<8x32xf32, #tpu.memory_space<vmem>>, vector<8x32xf32>
    %c0_i32_16 = arith.constant 0 : i32
    %c8_i32_17 = arith.constant 8 : i32
    %15 = arith.muli %c0_i32_16, %c8_i32_17 : i32
    %16 = tpu.assume_multiple %15, 8 : i32
    %17 = arith.index_cast %16 : i32 to index
    %c0_18 = arith.constant 0 : index
    %18 = vector.load %arg10[%17, %c0_18] : memref<64x128xf32, #tpu.memory_space<vmem>>, vector<8x128xf32>
    %19 = arith.truncf %13 : vector<8x32xf32> to vector<8x32xbf16>
    %cst_19 = arith.constant dense<0.000000e+00> : vector<8x128xf32>
    %20 = tpu.matmul %19, %10, %cst_19 {dimension_numbers = #tpu.dot_dimension_numbers<[1], [0], [0], [1], [0, 0, 1, 1], [], []>} : vector<8x32xbf16>, vector<32x128xbf16>, vector<8x128xf32> -> vector<8x128xf32>
    %21 = arith.addf %18, %20 : vector<8x128xf32>
    %22 = arith.negf %21 : vector<8x128xf32>
    %23 = math.exp %22 : vector<8x128xf32>
    %cst_20 = arith.constant 1.000000e+00 : f32
    %24 = vector.broadcast %cst_20 : f32 to vector<8x128xf32>
    %25 = arith.addf %24, %23 : vector<8x128xf32>
    %26 = arith.divf %24, %25 : vector<8x128xf32>
    %27 = math.tanh %21 : vector<8x128xf32>
    %28 = vector.extract_strided_slice %26 {offsets = [0, 0], sizes = [8, 32], strides = [1, 1]} : vector<8x128xf32> to vector<8x32xf32>
    %29 = vector.extract_strided_slice %26 {offsets = [0, 32], sizes = [8, 32], strides = [1, 1]} : vector<8x128xf32> to vector<8x32xf32>
    %30 = vector.extract_strided_slice %27 {offsets = [0, 64], sizes = [8, 32], strides = [1, 1]} : vector<8x128xf32> to vector<8x32xf32>
    %31 = vector.extract_strided_slice %26 {offsets = [0, 96], sizes = [8, 32], strides = [1, 1]} : vector<8x128xf32> to vector<8x32xf32>
    %32 = arith.mulf %29, %14 : vector<8x32xf32>
    %33 = arith.mulf %28, %30 : vector<8x32xf32>
    %34 = arith.addf %32, %33 : vector<8x32xf32>
    %35 = math.tanh %34 : vector<8x32xf32>
    %36 = arith.mulf %31, %35 : vector<8x32xf32>
    %37 = arith.addi %12, %c0_i32_16 : i32
    %38 = vector.broadcast %37 : i32 to vector<8x1xi32>
    %39 = arith.cmpi slt, %38, %11 : vector<8x1xi32>
    %40 = vector.shape_cast %39 : vector<8x1xi1> to vector<8x1xi1>
    %41 = vector.broadcast %40 : vector<8x1xi1> to vector<8x32xi1>
    %42 = arith.select %41, %34, %14 : vector<8x32xi1>, vector<8x32xf32>
    %43 = vector.shape_cast %39 : vector<8x1xi1> to vector<8x1xi1>
    %44 = vector.broadcast %43 : vector<8x1xi1> to vector<8x32xi1>
    %45 = arith.select %44, %36, %13 : vector<8x32xi1>, vector<8x32xf32>
    %cst_21 = arith.constant 0.000000e+00 : f32
    %46 = vector.shape_cast %39 : vector<8x1xi1> to vector<8x1xi1>
    %47 = vector.broadcast %46 : vector<8x1xi1> to vector<8x32xi1>
    %48 = vector.broadcast %cst_21 : f32 to vector<8x32xf32>
    %49 = arith.select %47, %36, %48 : vector<8x32xi1>, vector<8x32xf32>
    %50 = arith.index_cast %c0_i32_16 : i32 to index
    %c0_22 = arith.constant 0 : index
    %c0_23 = arith.constant 0 : index
    %51 = vector.load %arg6[%50, %c0_22, %c0_23] : memref<8x8x32xf32, #tpu.memory_space<vmem>>, vector<1x8x32xf32>
    %52 = vector.shape_cast %51 : vector<1x8x32xf32> to vector<8x32xf32>
    %53 = vector.shape_cast %49 : vector<8x32xf32> to vector<1x8x32xf32>
    tpu.vector_store %arg6[%50, %c0_22, %c0_23], %53 {strides = array<i32>} : memref<8x8x32xf32, #tpu.memory_space<vmem>>, vector<1x8x32xf32>,
    %c1_i32 = arith.constant 1 : i32
    %c8_i32_24 = arith.constant 8 : i32
    %54 = arith.muli %c1_i32, %c8_i32_24 : i32
    %55 = tpu.assume_multiple %54, 8 : i32
    %56 = arith.index_cast %55 : i32 to index
    %c0_25 = arith.constant 0 : index
    %57 = vector.load %arg10[%56, %c0_25] : memref<64x128xf32, #tpu.memory_space<vmem>>, vector<8x128xf32>
    %58 = arith.truncf %45 : vector<8x32xf32> to vector<8x32xbf16>
    %cst_26 = arith.constant dense<0.000000e+00> : vector<8x128xf32>
    %59 = tpu.matmul %58, %10, %cst_26 {dimension_numbers = #tpu.dot_dimension_numbers<[1], [0], [0], [1], [0, 0, 1, 1], [], []>} : vector<8x32xbf16>, vector<32x128xbf16>, vector<8x128xf32> -> vector<8x128xf32>
    %60 = arith.addf %57, %59 : vector<8x128xf32>
    %61 = arith.negf %60 : vector<8x128xf32>
    %62 = math.exp %61 : vector<8x128xf32>
    %cst_27 = arith.constant 1.000000e+00 : f32
    %63 = vector.broadcast %cst_27 : f32 to vector<8x128xf32>
    %64 = arith.addf %63, %62 : vector<8x128xf32>
    %65 = arith.divf %63, %64 : vector<8x128xf32>
    %66 = math.tanh %60 : vector<8x128xf32>
    %67 = vector.extract_strided_slice %65 {offsets = [0, 0], sizes = [8, 32], strides = [1, 1]} : vector<8x128xf32> to vector<8x32xf32>
    %68 = vector.extract_strided_slice %65 {offsets = [0, 32], sizes = [8, 32], strides = [1, 1]} : vector<8x128xf32> to vector<8x32xf32>
    %69 = vector.extract_strided_slice %66 {offsets = [0, 64], sizes = [8, 32], strides = [1, 1]} : vector<8x128xf32> to vector<8x32xf32>
    %70 = vector.extract_strided_slice %65 {offsets = [0, 96], sizes = [8, 32], strides = [1, 1]} : vector<8x128xf32> to vector<8x32xf32>
    %71 = arith.mulf %68, %42 : vector<8x32xf32>
    %72 = arith.mulf %67, %69 : vector<8x32xf32>
    %73 = arith.addf %71, %72 : vector<8x32xf32>
    %74 = math.tanh %73 : vector<8x32xf32>
    %75 = arith.mulf %70, %74 : vector<8x32xf32>
    %76 = arith.addi %12, %c1_i32 : i32
    %77 = vector.broadcast %76 : i32 to vector<8x1xi32>
    %78 = arith.cmpi slt, %77, %11 : vector<8x1xi32>
    %79 = vector.shape_cast %78 : vector<8x1xi1> to vector<8x1xi1>
    %80 = vector.broadcast %79 : vector<8x1xi1> to vector<8x32xi1>
    %81 = arith.select %80, %73, %42 : vector<8x32xi1>, vector<8x32xf32>
    %82 = vector.shape_cast %78 : vector<8x1xi1> to vector<8x1xi1>
    %83 = vector.broadcast %82 : vector<8x1xi1> to vector<8x32xi1>
    %84 = arith.select %83, %75, %45 : vector<8x32xi1>, vector<8x32xf32>
    %cst_28 = arith.constant 0.000000e+00 : f32
    %85 = vector.shape_cast %78 : vector<8x1xi1> to vector<8x1xi1>
    %86 = vector.broadcast %85 : vector<8x1xi1> to vector<8x32xi1>
    %87 = vector.broadcast %cst_28 : f32 to vector<8x32xf32>
    %88 = arith.select %86, %75, %87 : vector<8x32xi1>, vector<8x32xf32>
    %89 = arith.index_cast %c1_i32 : i32 to index
    %c0_29 = arith.constant 0 : index
    %c0_30 = arith.constant 0 : index
    %90 = vector.load %arg6[%89, %c0_29, %c0_30] : memref<8x8x32xf32, #tpu.memory_space<vmem>>, vector<1x8x32xf32>
    %91 = vector.shape_cast %90 : vector<1x8x32xf32> to vector<8x32xf32>
    %92 = vector.shape_cast %88 : vector<8x32xf32> to vector<1x8x32xf32>
    tpu.vector_store %arg6[%89, %c0_29, %c0_30], %92 {strides = array<i32>} : memref<8x8x32xf32, #tpu.memory_space<vmem>>, vector<1x8x32xf32>,
    %c2_i32 = arith.constant 2 : i32
    %c8_i32_31 = arith.constant 8 : i32
    %93 = arith.muli %c2_i32, %c8_i32_31 : i32
    %94 = tpu.assume_multiple %93, 8 : i32
    %95 = arith.index_cast %94 : i32 to index
    %c0_32 = arith.constant 0 : index
    %96 = vector.load %arg10[%95, %c0_32] : memref<64x128xf32, #tpu.memory_space<vmem>>, vector<8x128xf32>
    %97 = arith.truncf %84 : vector<8x32xf32> to vector<8x32xbf16>
    %cst_33 = arith.constant dense<0.000000e+00> : vector<8x128xf32>
    %98 = tpu.matmul %97, %10, %cst_33 {dimension_numbers = #tpu.dot_dimension_numbers<[1], [0], [0], [1], [0, 0, 1, 1], [], []>} : vector<8x32xbf16>, vector<32x128xbf16>, vector<8x128xf32> -> vector<8x128xf32>
    %99 = arith.addf %96, %98 : vector<8x128xf32>
    %100 = arith.negf %99 : vector<8x128xf32>
    %101 = math.exp %100 : vector<8x128xf32>
    %cst_34 = arith.constant 1.000000e+00 : f32
    %102 = vector.broadcast %cst_34 : f32 to vector<8x128xf32>
    %103 = arith.addf %102, %101 : vector<8x128xf32>
    %104 = arith.divf %102, %103 : vector<8x128xf32>
    %105 = math.tanh %99 : vector<8x128xf32>
    %106 = vector.extract_strided_slice %104 {offsets = [0, 0], sizes = [8, 32], strides = [1, 1]} : vector<8x128xf32> to vector<8x32xf32>
    %107 = vector.extract_strided_slice %104 {offsets = [0, 32], sizes = [8, 32], strides = [1, 1]} : vector<8x128xf32> to vector<8x32xf32>
    %108 = vector.extract_strided_slice %105 {offsets = [0, 64], sizes = [8, 32], strides = [1, 1]} : vector<8x128xf32> to vector<8x32xf32>
    %109 = vector.extract_strided_slice %104 {offsets = [0, 96], sizes = [8, 32], strides = [1, 1]} : vector<8x128xf32> to vector<8x32xf32>
    %110 = arith.mulf %107, %81 : vector<8x32xf32>
    %111 = arith.mulf %106, %108 : vector<8x32xf32>
    %112 = arith.addf %110, %111 : vector<8x32xf32>
    %113 = math.tanh %112 : vector<8x32xf32>
    %114 = arith.mulf %109, %113 : vector<8x32xf32>
    %115 = arith.addi %12, %c2_i32 : i32
    %116 = vector.broadcast %115 : i32 to vector<8x1xi32>
    %117 = arith.cmpi slt, %116, %11 : vector<8x1xi32>
    %118 = vector.shape_cast %117 : vector<8x1xi1> to vector<8x1xi1>
    %119 = vector.broadcast %118 : vector<8x1xi1> to vector<8x32xi1>
    %120 = arith.select %119, %112, %81 : vector<8x32xi1>, vector<8x32xf32>
    %121 = vector.shape_cast %117 : vector<8x1xi1> to vector<8x1xi1>
    %122 = vector.broadcast %121 : vector<8x1xi1> to vector<8x32xi1>
    %123 = arith.select %122, %114, %84 : vector<8x32xi1>, vector<8x32xf32>
    %cst_35 = arith.constant 0.000000e+00 : f32
    %124 = vector.shape_cast %117 : vector<8x1xi1> to vector<8x1xi1>
    %125 = vector.broadcast %124 : vector<8x1xi1> to vector<8x32xi1>
    %126 = vector.broadcast %cst_35 : f32 to vector<8x32xf32>
    %127 = arith.select %125, %114, %126 : vector<8x32xi1>, vector<8x32xf32>
    %128 = arith.index_cast %c2_i32 : i32 to index
    %c0_36 = arith.constant 0 : index
    %c0_37 = arith.constant 0 : index
    %129 = vector.load %arg6[%128, %c0_36, %c0_37] : memref<8x8x32xf32, #tpu.memory_space<vmem>>, vector<1x8x32xf32>
    %130 = vector.shape_cast %129 : vector<1x8x32xf32> to vector<8x32xf32>
    %131 = vector.shape_cast %127 : vector<8x32xf32> to vector<1x8x32xf32>
    tpu.vector_store %arg6[%128, %c0_36, %c0_37], %131 {strides = array<i32>} : memref<8x8x32xf32, #tpu.memory_space<vmem>>, vector<1x8x32xf32>,
    %c3_i32 = arith.constant 3 : i32
    %c8_i32_38 = arith.constant 8 : i32
    %132 = arith.muli %c3_i32, %c8_i32_38 : i32
    %133 = tpu.assume_multiple %132, 8 : i32
    %134 = arith.index_cast %133 : i32 to index
    %c0_39 = arith.constant 0 : index
    %135 = vector.load %arg10[%134, %c0_39] : memref<64x128xf32, #tpu.memory_space<vmem>>, vector<8x128xf32>
    %136 = arith.truncf %123 : vector<8x32xf32> to vector<8x32xbf16>
    %cst_40 = arith.constant dense<0.000000e+00> : vector<8x128xf32>
    %137 = tpu.matmul %136, %10, %cst_40 {dimension_numbers = #tpu.dot_dimension_numbers<[1], [0], [0], [1], [0, 0, 1, 1], [], []>} : vector<8x32xbf16>, vector<32x128xbf16>, vector<8x128xf32> -> vector<8x128xf32>
    %138 = arith.addf %135, %137 : vector<8x128xf32>
    %139 = arith.negf %138 : vector<8x128xf32>
    %140 = math.exp %139 : vector<8x128xf32>
    %cst_41 = arith.constant 1.000000e+00 : f32
    %141 = vector.broadcast %cst_41 : f32 to vector<8x128xf32>
    %142 = arith.addf %141, %140 : vector<8x128xf32>
    %143 = arith.divf %141, %142 : vector<8x128xf32>
    %144 = math.tanh %138 : vector<8x128xf32>
    %145 = vector.extract_strided_slice %143 {offsets = [0, 0], sizes = [8, 32], strides = [1, 1]} : vector<8x128xf32> to vector<8x32xf32>
    %146 = vector.extract_strided_slice %143 {offsets = [0, 32], sizes = [8, 32], strides = [1, 1]} : vector<8x128xf32> to vector<8x32xf32>
    %147 = vector.extract_strided_slice %144 {offsets = [0, 64], sizes = [8, 32], strides = [1, 1]} : vector<8x128xf32> to vector<8x32xf32>
    %148 = vector.extract_strided_slice %143 {offsets = [0, 96], sizes = [8, 32], strides = [1, 1]} : vector<8x128xf32> to vector<8x32xf32>
    %149 = arith.mulf %146, %120 : vector<8x32xf32>
    %150 = arith.mulf %145, %147 : vector<8x32xf32>
    %151 = arith.addf %149, %150 : vector<8x32xf32>
    %152 = math.tanh %151 : vector<8x32xf32>
    %153 = arith.mulf %148, %152 : vector<8x32xf32>
    %154 = arith.addi %12, %c3_i32 : i32
    %155 = vector.broadcast %154 : i32 to vector<8x1xi32>
    %156 = arith.cmpi slt, %155, %11 : vector<8x1xi32>
    %157 = vector.shape_cast %156 : vector<8x1xi1> to vector<8x1xi1>
    %158 = vector.broadcast %157 : vector<8x1xi1> to vector<8x32xi1>
    %159 = arith.select %158, %151, %120 : vector<8x32xi1>, vector<8x32xf32>
    %160 = vector.shape_cast %156 : vector<8x1xi1> to vector<8x1xi1>
    %161 = vector.broadcast %160 : vector<8x1xi1> to vector<8x32xi1>
    %162 = arith.select %161, %153, %123 : vector<8x32xi1>, vector<8x32xf32>
    %cst_42 = arith.constant 0.000000e+00 : f32
    %163 = vector.shape_cast %156 : vector<8x1xi1> to vector<8x1xi1>
    %164 = vector.broadcast %163 : vector<8x1xi1> to vector<8x32xi1>
    %165 = vector.broadcast %cst_42 : f32 to vector<8x32xf32>
    %166 = arith.select %164, %153, %165 : vector<8x32xi1>, vector<8x32xf32>
    %167 = arith.index_cast %c3_i32 : i32 to index
    %c0_43 = arith.constant 0 : index
    %c0_44 = arith.constant 0 : index
    %168 = vector.load %arg6[%167, %c0_43, %c0_44] : memref<8x8x32xf32, #tpu.memory_space<vmem>>, vector<1x8x32xf32>
    %169 = vector.shape_cast %168 : vector<1x8x32xf32> to vector<8x32xf32>
    %170 = vector.shape_cast %166 : vector<8x32xf32> to vector<1x8x32xf32>
    tpu.vector_store %arg6[%167, %c0_43, %c0_44], %170 {strides = array<i32>} : memref<8x8x32xf32, #tpu.memory_space<vmem>>, vector<1x8x32xf32>,
    %c4_i32 = arith.constant 4 : i32
    %c8_i32_45 = arith.constant 8 : i32
    %171 = arith.muli %c4_i32, %c8_i32_45 : i32
    %172 = tpu.assume_multiple %171, 8 : i32
    %173 = arith.index_cast %172 : i32 to index
    %c0_46 = arith.constant 0 : index
    %174 = vector.load %arg10[%173, %c0_46] : memref<64x128xf32, #tpu.memory_space<vmem>>, vector<8x128xf32>
    %175 = arith.truncf %162 : vector<8x32xf32> to vector<8x32xbf16>
    %cst_47 = arith.constant dense<0.000000e+00> : vector<8x128xf32>
    %176 = tpu.matmul %175, %10, %cst_47 {dimension_numbers = #tpu.dot_dimension_numbers<[1], [0], [0], [1], [0, 0, 1, 1], [], []>} : vector<8x32xbf16>, vector<32x128xbf16>, vector<8x128xf32> -> vector<8x128xf32>
    %177 = arith.addf %174, %176 : vector<8x128xf32>
    %178 = arith.negf %177 : vector<8x128xf32>
    %179 = math.exp %178 : vector<8x128xf32>
    %cst_48 = arith.constant 1.000000e+00 : f32
    %180 = vector.broadcast %cst_48 : f32 to vector<8x128xf32>
    %181 = arith.addf %180, %179 : vector<8x128xf32>
    %182 = arith.divf %180, %181 : vector<8x128xf32>
    %183 = math.tanh %177 : vector<8x128xf32>
    %184 = vector.extract_strided_slice %182 {offsets = [0, 0], sizes = [8, 32], strides = [1, 1]} : vector<8x128xf32> to vector<8x32xf32>
    %185 = vector.extract_strided_slice %182 {offsets = [0, 32], sizes = [8, 32], strides = [1, 1]} : vector<8x128xf32> to vector<8x32xf32>
    %186 = vector.extract_strided_slice %183 {offsets = [0, 64], sizes = [8, 32], strides = [1, 1]} : vector<8x128xf32> to vector<8x32xf32>
    %187 = vector.extract_strided_slice %182 {offsets = [0, 96], sizes = [8, 32], strides = [1, 1]} : vector<8x128xf32> to vector<8x32xf32>
    %188 = arith.mulf %185, %159 : vector<8x32xf32>
    %189 = arith.mulf %184, %186 : vector<8x32xf32>
    %190 = arith.addf %188, %189 : vector<8x32xf32>
    %191 = math.tanh %190 : vector<8x32xf32>
    %192 = arith.mulf %187, %191 : vector<8x32xf32>
    %193 = arith.addi %12, %c4_i32 : i32
    %194 = vector.broadcast %193 : i32 to vector<8x1xi32>
    %195 = arith.cmpi slt, %194, %11 : vector<8x1xi32>
    %196 = vector.shape_cast %195 : vector<8x1xi1> to vector<8x1xi1>
    %197 = vector.broadcast %196 : vector<8x1xi1> to vector<8x32xi1>
    %198 = arith.select %197, %190, %159 : vector<8x32xi1>, vector<8x32xf32>
    %199 = vector.shape_cast %195 : vector<8x1xi1> to vector<8x1xi1>
    %200 = vector.broadcast %199 : vector<8x1xi1> to vector<8x32xi1>
    %201 = arith.select %200, %192, %162 : vector<8x32xi1>, vector<8x32xf32>
    %cst_49 = arith.constant 0.000000e+00 : f32
    %202 = vector.shape_cast %195 : vector<8x1xi1> to vector<8x1xi1>
    %203 = vector.broadcast %202 : vector<8x1xi1> to vector<8x32xi1>
    %204 = vector.broadcast %cst_49 : f32 to vector<8x32xf32>
    %205 = arith.select %203, %192, %204 : vector<8x32xi1>, vector<8x32xf32>
    %206 = arith.index_cast %c4_i32 : i32 to index
    %c0_50 = arith.constant 0 : index
    %c0_51 = arith.constant 0 : index
    %207 = vector.load %arg6[%206, %c0_50, %c0_51] : memref<8x8x32xf32, #tpu.memory_space<vmem>>, vector<1x8x32xf32>
    %208 = vector.shape_cast %207 : vector<1x8x32xf32> to vector<8x32xf32>
    %209 = vector.shape_cast %205 : vector<8x32xf32> to vector<1x8x32xf32>
    tpu.vector_store %arg6[%206, %c0_50, %c0_51], %209 {strides = array<i32>} : memref<8x8x32xf32, #tpu.memory_space<vmem>>, vector<1x8x32xf32>,
    %c5_i32 = arith.constant 5 : i32
    %c8_i32_52 = arith.constant 8 : i32
    %210 = arith.muli %c5_i32, %c8_i32_52 : i32
    %211 = tpu.assume_multiple %210, 8 : i32
    %212 = arith.index_cast %211 : i32 to index
    %c0_53 = arith.constant 0 : index
    %213 = vector.load %arg10[%212, %c0_53] : memref<64x128xf32, #tpu.memory_space<vmem>>, vector<8x128xf32>
    %214 = arith.truncf %201 : vector<8x32xf32> to vector<8x32xbf16>
    %cst_54 = arith.constant dense<0.000000e+00> : vector<8x128xf32>
    %215 = tpu.matmul %214, %10, %cst_54 {dimension_numbers = #tpu.dot_dimension_numbers<[1], [0], [0], [1], [0, 0, 1, 1], [], []>} : vector<8x32xbf16>, vector<32x128xbf16>, vector<8x128xf32> -> vector<8x128xf32>
    %216 = arith.addf %213, %215 : vector<8x128xf32>
    %217 = arith.negf %216 : vector<8x128xf32>
    %218 = math.exp %217 : vector<8x128xf32>
    %cst_55 = arith.constant 1.000000e+00 : f32
    %219 = vector.broadcast %cst_55 : f32 to vector<8x128xf32>
    %220 = arith.addf %219, %218 : vector<8x128xf32>
    %221 = arith.divf %219, %220 : vector<8x128xf32>
    %222 = math.tanh %216 : vector<8x128xf32>
    %223 = vector.extract_strided_slice %221 {offsets = [0, 0], sizes = [8, 32], strides = [1, 1]} : vector<8x128xf32> to vector<8x32xf32>
    %224 = vector.extract_strided_slice %221 {offsets = [0, 32], sizes = [8, 32], strides = [1, 1]} : vector<8x128xf32> to vector<8x32xf32>
    %225 = vector.extract_strided_slice %222 {offsets = [0, 64], sizes = [8, 32], strides = [1, 1]} : vector<8x128xf32> to vector<8x32xf32>
    %226 = vector.extract_strided_slice %221 {offsets = [0, 96], sizes = [8, 32], strides = [1, 1]} : vector<8x128xf32> to vector<8x32xf32>
    %227 = arith.mulf %224, %198 : vector<8x32xf32>
    %228 = arith.mulf %223, %225 : vector<8x32xf32>
    %229 = arith.addf %227, %228 : vector<8x32xf32>
    %230 = math.tanh %229 : vector<8x32xf32>
    %231 = arith.mulf %226, %230 : vector<8x32xf32>
    %232 = arith.addi %12, %c5_i32 : i32
    %233 = vector.broadcast %232 : i32 to vector<8x1xi32>
    %234 = arith.cmpi slt, %233, %11 : vector<8x1xi32>
    %235 = vector.shape_cast %234 : vector<8x1xi1> to vector<8x1xi1>
    %236 = vector.broadcast %235 : vector<8x1xi1> to vector<8x32xi1>
    %237 = arith.select %236, %229, %198 : vector<8x32xi1>, vector<8x32xf32>
    %238 = vector.shape_cast %234 : vector<8x1xi1> to vector<8x1xi1>
    %239 = vector.broadcast %238 : vector<8x1xi1> to vector<8x32xi1>
    %240 = arith.select %239, %231, %201 : vector<8x32xi1>, vector<8x32xf32>
    %cst_56 = arith.constant 0.000000e+00 : f32
    %241 = vector.shape_cast %234 : vector<8x1xi1> to vector<8x1xi1>
    %242 = vector.broadcast %241 : vector<8x1xi1> to vector<8x32xi1>
    %243 = vector.broadcast %cst_56 : f32 to vector<8x32xf32>
    %244 = arith.select %242, %231, %243 : vector<8x32xi1>, vector<8x32xf32>
    %245 = arith.index_cast %c5_i32 : i32 to index
    %c0_57 = arith.constant 0 : index
    %c0_58 = arith.constant 0 : index
    %246 = vector.load %arg6[%245, %c0_57, %c0_58] : memref<8x8x32xf32, #tpu.memory_space<vmem>>, vector<1x8x32xf32>
    %247 = vector.shape_cast %246 : vector<1x8x32xf32> to vector<8x32xf32>
    %248 = vector.shape_cast %244 : vector<8x32xf32> to vector<1x8x32xf32>
    tpu.vector_store %arg6[%245, %c0_57, %c0_58], %248 {strides = array<i32>} : memref<8x8x32xf32, #tpu.memory_space<vmem>>, vector<1x8x32xf32>,
    %c6_i32 = arith.constant 6 : i32
    %c8_i32_59 = arith.constant 8 : i32
    %249 = arith.muli %c6_i32, %c8_i32_59 : i32
    %250 = tpu.assume_multiple %249, 8 : i32
    %251 = arith.index_cast %250 : i32 to index
    %c0_60 = arith.constant 0 : index
    %252 = vector.load %arg10[%251, %c0_60] : memref<64x128xf32, #tpu.memory_space<vmem>>, vector<8x128xf32>
    %253 = arith.truncf %240 : vector<8x32xf32> to vector<8x32xbf16>
    %cst_61 = arith.constant dense<0.000000e+00> : vector<8x128xf32>
    %254 = tpu.matmul %253, %10, %cst_61 {dimension_numbers = #tpu.dot_dimension_numbers<[1], [0], [0], [1], [0, 0, 1, 1], [], []>} : vector<8x32xbf16>, vector<32x128xbf16>, vector<8x128xf32> -> vector<8x128xf32>
    %255 = arith.addf %252, %254 : vector<8x128xf32>
    %256 = arith.negf %255 : vector<8x128xf32>
    %257 = math.exp %256 : vector<8x128xf32>
    %cst_62 = arith.constant 1.000000e+00 : f32
    %258 = vector.broadcast %cst_62 : f32 to vector<8x128xf32>
    %259 = arith.addf %258, %257 : vector<8x128xf32>
    %260 = arith.divf %258, %259 : vector<8x128xf32>
    %261 = math.tanh %255 : vector<8x128xf32>
    %262 = vector.extract_strided_slice %260 {offsets = [0, 0], sizes = [8, 32], strides = [1, 1]} : vector<8x128xf32> to vector<8x32xf32>
    %263 = vector.extract_strided_slice %260 {offsets = [0, 32], sizes = [8, 32], strides = [1, 1]} : vector<8x128xf32> to vector<8x32xf32>
    %264 = vector.extract_strided_slice %261 {offsets = [0, 64], sizes = [8, 32], strides = [1, 1]} : vector<8x128xf32> to vector<8x32xf32>
    %265 = vector.extract_strided_slice %260 {offsets = [0, 96], sizes = [8, 32], strides = [1, 1]} : vector<8x128xf32> to vector<8x32xf32>
    %266 = arith.mulf %263, %237 : vector<8x32xf32>
    %267 = arith.mulf %262, %264 : vector<8x32xf32>
    %268 = arith.addf %266, %267 : vector<8x32xf32>
    %269 = math.tanh %268 : vector<8x32xf32>
    %270 = arith.mulf %265, %269 : vector<8x32xf32>
    %271 = arith.addi %12, %c6_i32 : i32
    %272 = vector.broadcast %271 : i32 to vector<8x1xi32>
    %273 = arith.cmpi slt, %272, %11 : vector<8x1xi32>
    %274 = vector.shape_cast %273 : vector<8x1xi1> to vector<8x1xi1>
    %275 = vector.broadcast %274 : vector<8x1xi1> to vector<8x32xi1>
    %276 = arith.select %275, %268, %237 : vector<8x32xi1>, vector<8x32xf32>
    %277 = vector.shape_cast %273 : vector<8x1xi1> to vector<8x1xi1>
    %278 = vector.broadcast %277 : vector<8x1xi1> to vector<8x32xi1>
    %279 = arith.select %278, %270, %240 : vector<8x32xi1>, vector<8x32xf32>
    %cst_63 = arith.constant 0.000000e+00 : f32
    %280 = vector.shape_cast %273 : vector<8x1xi1> to vector<8x1xi1>
    %281 = vector.broadcast %280 : vector<8x1xi1> to vector<8x32xi1>
    %282 = vector.broadcast %cst_63 : f32 to vector<8x32xf32>
    %283 = arith.select %281, %270, %282 : vector<8x32xi1>, vector<8x32xf32>
    %284 = arith.index_cast %c6_i32 : i32 to index
    %c0_64 = arith.constant 0 : index
    %c0_65 = arith.constant 0 : index
    %285 = vector.load %arg6[%284, %c0_64, %c0_65] : memref<8x8x32xf32, #tpu.memory_space<vmem>>, vector<1x8x32xf32>
    %286 = vector.shape_cast %285 : vector<1x8x32xf32> to vector<8x32xf32>
    %287 = vector.shape_cast %283 : vector<8x32xf32> to vector<1x8x32xf32>
    tpu.vector_store %arg6[%284, %c0_64, %c0_65], %287 {strides = array<i32>} : memref<8x8x32xf32, #tpu.memory_space<vmem>>, vector<1x8x32xf32>,
    %c7_i32 = arith.constant 7 : i32
    %c8_i32_66 = arith.constant 8 : i32
    %288 = arith.muli %c7_i32, %c8_i32_66 : i32
    %289 = tpu.assume_multiple %288, 8 : i32
    %290 = arith.index_cast %289 : i32 to index
    %c0_67 = arith.constant 0 : index
    %291 = vector.load %arg10[%290, %c0_67] : memref<64x128xf32, #tpu.memory_space<vmem>>, vector<8x128xf32>
    %292 = arith.truncf %279 : vector<8x32xf32> to vector<8x32xbf16>
    %cst_68 = arith.constant dense<0.000000e+00> : vector<8x128xf32>
    %293 = tpu.matmul %292, %10, %cst_68 {dimension_numbers = #tpu.dot_dimension_numbers<[1], [0], [0], [1], [0, 0, 1, 1], [], []>} : vector<8x32xbf16>, vector<32x128xbf16>, vector<8x128xf32> -> vector<8x128xf32>
    %294 = arith.addf %291, %293 : vector<8x128xf32>
    %295 = arith.negf %294 : vector<8x128xf32>
    %296 = math.exp %295 : vector<8x128xf32>
    %cst_69 = arith.constant 1.000000e+00 : f32
    %297 = vector.broadcast %cst_69 : f32 to vector<8x128xf32>
    %298 = arith.addf %297, %296 : vector<8x128xf32>
    %299 = arith.divf %297, %298 : vector<8x128xf32>
    %300 = math.tanh %294 : vector<8x128xf32>
    %301 = vector.extract_strided_slice %299 {offsets = [0, 0], sizes = [8, 32], strides = [1, 1]} : vector<8x128xf32> to vector<8x32xf32>
    %302 = vector.extract_strided_slice %299 {offsets = [0, 32], sizes = [8, 32], strides = [1, 1]} : vector<8x128xf32> to vector<8x32xf32>
    %303 = vector.extract_strided_slice %300 {offsets = [0, 64], sizes = [8, 32], strides = [1, 1]} : vector<8x128xf32> to vector<8x32xf32>
    %304 = vector.extract_strided_slice %299 {offsets = [0, 96], sizes = [8, 32], strides = [1, 1]} : vector<8x128xf32> to vector<8x32xf32>
    %305 = arith.mulf %302, %276 : vector<8x32xf32>
    %306 = arith.mulf %301, %303 : vector<8x32xf32>
    %307 = arith.addf %305, %306 : vector<8x32xf32>
    %308 = math.tanh %307 : vector<8x32xf32>
    %309 = arith.mulf %304, %308 : vector<8x32xf32>
    %310 = arith.addi %12, %c7_i32 : i32
    %311 = vector.broadcast %310 : i32 to vector<8x1xi32>
    %312 = arith.cmpi slt, %311, %11 : vector<8x1xi32>
    %313 = vector.shape_cast %312 : vector<8x1xi1> to vector<8x1xi1>
    %314 = vector.broadcast %313 : vector<8x1xi1> to vector<8x32xi1>
    %315 = arith.select %314, %307, %276 : vector<8x32xi1>, vector<8x32xf32>
    %316 = vector.shape_cast %312 : vector<8x1xi1> to vector<8x1xi1>
    %317 = vector.broadcast %316 : vector<8x1xi1> to vector<8x32xi1>
    %318 = arith.select %317, %309, %279 : vector<8x32xi1>, vector<8x32xf32>
    %cst_70 = arith.constant 0.000000e+00 : f32
    %319 = vector.shape_cast %312 : vector<8x1xi1> to vector<8x1xi1>
    %320 = vector.broadcast %319 : vector<8x1xi1> to vector<8x32xi1>
    %321 = vector.broadcast %cst_70 : f32 to vector<8x32xf32>
    %322 = arith.select %320, %309, %321 : vector<8x32xi1>, vector<8x32xf32>
    %323 = arith.index_cast %c7_i32 : i32 to index
    %c0_71 = arith.constant 0 : index
    %c0_72 = arith.constant 0 : index
    %324 = vector.load %arg6[%323, %c0_71, %c0_72] : memref<8x8x32xf32, #tpu.memory_space<vmem>>, vector<1x8x32xf32>
    %325 = vector.shape_cast %324 : vector<1x8x32xf32> to vector<8x32xf32>
    %326 = vector.shape_cast %322 : vector<8x32xf32> to vector<1x8x32xf32>
    tpu.vector_store %arg6[%323, %c0_71, %c0_72], %326 {strides = array<i32>} : memref<8x8x32xf32, #tpu.memory_space<vmem>>, vector<1x8x32xf32>,
    %c8_i32_73 = arith.constant 8 : i32
    %c0_74 = arith.constant 0 : index
    %c0_75 = arith.constant 0 : index
    %327 = vector.load %arg8[%c0_74, %c0_75] : memref<8x32xf32, #tpu.memory_space<vmem>>, vector<8x32xf32>
    tpu.vector_store %arg8[%c0_74, %c0_75], %318 {strides = array<i32>} : memref<8x32xf32, #tpu.memory_space<vmem>>, vector<8x32xf32>,
    %c0_76 = arith.constant 0 : index
    %c0_77 = arith.constant 0 : index
    %328 = vector.load %arg9[%c0_76, %c0_77] : memref<8x32xf32, #tpu.memory_space<vmem>>, vector<8x32xf32>
    tpu.vector_store %arg9[%c0_76, %c0_77], %315 {strides = array<i32>} : memref<8x32xf32, #tpu.memory_space<vmem>>, vector<8x32xf32>,
    %c0_78 = arith.constant 0 : index
    %c0_79 = arith.constant 0 : index
    %329 = vector.load %arg7[%c0_78, %c0_79] : memref<8x32xf32, #tpu.memory_space<vmem>>, vector<8x32xf32>
    tpu.vector_store %arg7[%c0_78, %c0_79], %318 {strides = array<i32>} : memref<8x32xf32, #tpu.memory_space<vmem>>, vector<8x32xf32>,
    return
  }
  func.func @transform_0(%arg0: i32) -> (i32, i32) {
    %c0_i32 = arith.constant 0 : i32
    %c0_i32_0 = arith.constant 0 : i32
    %c0_i32_1 = arith.constant 0 : i32
    return %c0_i32, %c0_i32_0 : i32, i32
  }
  func.func @transform_1(%arg0: i32) -> (i32, i32) {
    %c0_i32 = arith.constant 0 : i32
    %c0_i32_0 = arith.constant 0 : i32
    return %arg0, %c0_i32 : i32, i32
  }
  func.func @transform_2(%arg0: i32) -> (i32, i32) {
    %c0_i32 = arith.constant 0 : i32
    %c0_i32_0 = arith.constant 0 : i32
    %c0_i32_1 = arith.constant 0 : i32
    return %c0_i32, %c0_i32_0 : i32, i32
  }
  func.func @transform_3(%arg0: i32) -> (i32, i32) {
    %c0_i32 = arith.constant 0 : i32
    %c0_i32_0 = arith.constant 0 : i32
    %c0_i32_1 = arith.constant 0 : i32
    return %c0_i32, %c0_i32_0 : i32, i32
  }
  func.func @transform_4(%arg0: i32) -> (i32, i32) {
    %c0_i32 = arith.constant 0 : i32
    %c0_i32_0 = arith.constant 0 : i32
    %c0_i32_1 = arith.constant 0 : i32
    return %c0_i32, %c0_i32_0 : i32, i32
  }
  func.func @transform_5(%arg0: i32) -> (i32, i32, i32) {
    %c0_i32 = arith.constant 0 : i32
    %c0_i32_0 = arith.constant 0 : i32
    %c0_i32_1 = arith.constant 0 : i32
    return %arg0, %c0_i32, %c0_i32_0 : i32, i32, i32
  }
  func.func @transform_6(%arg0: i32) -> (i32, i32) {
    %c0_i32 = arith.constant 0 : i32
    %c0_i32_0 = arith.constant 0 : i32
    %c0_i32_1 = arith.constant 0 : i32
    return %c0_i32, %c0_i32_0 : i32, i32
  }
}

</mosaic_0001>

<llo_original>
// kernel: rnn_base_encoder_forward.1
$region0: #{rnn_base_encoder_forward.1}
  #allocation0 [shape = 'u32[]', space=smem, size = 0x4, offset = 0x4, fixed_abs, tag = 'smem constant byte address 0x4 - core index']
  #allocation1 [shape = 'u32[144,128]{1,0:T(1,128)}', space=vmem, size = 0x12000, scoped, tag = 'internal scratch']
  #allocation2 [shape = 'f32[8,32]{1,0:T(8,128)}', space=vmem, size = 0x1000, scoped, tag = 'scratch operand']
  #allocation3 [shape = 'f32[8,32]{1,0:T(8,128)}', space=vmem, size = 0x1000, scoped, tag = 'scratch operand']
  #allocation4 [shape = 'f32[64,128]{1,0:T(8,128)}', space=vmem, size = 0x8000, scoped, tag = 'scratch operand']
  %s0 = inlined_call_operand.vmem [shape: s32[8,1], index: 0, kind: input, shape index: {}]
  %s1 = inlined_call_operand.vmem [shape: bf16[128,16], index: 1, kind: input, shape index: {}]
  %s2 = inlined_call_operand.vmem [shape: bf16[16,128], index: 2, kind: input, shape index: {}]
  %s3 = inlined_call_operand.vmem [shape: bf16[32,128], index: 3, kind: input, shape index: {}]
  %s4 = inlined_call_operand.vmem [shape: f32[1,128], index: 4, kind: input, shape index: {}]
  %s5 = inlined_call_operand.vmem [shape: f32[16,8,32], index: 5, kind: output, shape index: {0}]
  %s6 = inlined_call_operand.hbm [shape: f32[8,32], index: 6, kind: output, shape index: {1}]
  %7 = xla_tuple %s5, %s6
  %s8 = sld [smem:[#allocation0]]
  $region65: #{rnn_base_encoder_forward.1} parent=0
    _
  %s10 = ssub.s32 1, %s8
  %s11 = scalar_select 0, %s10, %s8
  $region1: #{rnn_base_encoder_forward.1} parent=0
    #allocation5 [shape = 'u8[4096]{0}', space=vmem, size = 0x1000, scoped, tag = 'output window, operand 1, single buffered']
    #allocation6 [shape = 's32[2]{0}', space=sflag, size = 0x8, scoped, tag = 'scoped memory for rnn_base_encoder_forward.1']
    %12 = vsyncpa [#allocation6], 0
    loop: start=0, step=1, limit=4
    $region2: #{rnn_base_encoder_forward.1} parent=1 // loop_pre_header
      _
    $region3: #{rnn_base_encoder_forward.1} parent=1 // loop_header
      %s14 = sphi 0, %s18
      %p15 = scmp.ge.s32.totalorder %s14, 4
      %s22 = sphi 0, %s22
      %s24 = sphi 0, %s22
      %s25 = sphi 0, %s24
      %s39 = sphi 0, %s25
      %s45 = sphi 0, %s47
      %s48 = sphi 0, %s45
      %s49 = sphi 0, %s48
      %s65 = sphi 0, %s49
      %s69 = sphi 0, %s69
      %s71 = sphi 0, %s69
      %s72 = sphi 0, %s71
      %s86 = sphi 0, %s72
      %s90 = sphi 0, %s90
      %s92 = sphi 0, %s90
      %s93 = sphi 0, %s92
      %s107 = sphi 0, %s93
      %s111 = sphi 0, %s111
      %s113 = sphi 0, %s111
      %s114 = sphi 0, %s113
      %s128 = sphi 0, %s114
      %s134 = sphi 0, %s136
      %s137 = sphi 0, %s134
      %s138 = sphi 0, %s137
      %s154 = sphi 0, %s138
      %s158 = sphi 0, %s158
      %s160 = sphi 0, %s158
      %s161 = sphi 0, %s160
      %s175 = sphi 0, %s161
    $region4: #{rnn_base_encoder_forward.1} parent=1 // loop_header_branch
      %17 = sbr.rel (%p15) target = $region8
    $region5: #{rnn_base_encoder_forward.1} parent=1 // loop_body
      %s19 = ssub.s32 %s14, 1
      %s20 = ssub.s32 %s14, 2
      %s21 = sadd.s32 %s14, 1
      %s23 = sadd.s32 %s22, 1
      %p26 = scmp.eq.s32.totalorder %s14, 1
      %p27 = scmp.ne.s32.totalorder %s22, %s24
      %p28 = scmp.eq.s32.totalorder %s14, 0
      %p29 = por %p27, %p28
      %p30 = scmp.ne.s32.totalorder %s22, %s24
      %p31 = scmp.eq.s32.totalorder %s19, 1
      %p32 = por %p30, %p31
      %p33 = scmp.ne.s32.totalorder %s24, %s25
      %p34 = scmp.eq.s32.totalorder %s19, 0
      %p35 = por %p33, %p34
      %p36 = scmp.ne.s32.totalorder %s24, %s25
      %p37 = scmp.eq.s32.totalorder %s20, 1
      %p38 = por %p36, %p37
      %p40 = scmp.ne.s32.totalorder %s25, %s39
      %p41 = scmp.eq.s32.totalorder %s20, 0
      %p42 = por %p40, %p41
      %s43 = ssub.s32 %s14, %s21
      %p44 = scmp.eq.s32.totalorder %s43, 0
      %s46 = sadd.s32 %s45, 1
      %s47 = scalar_select %p44, %s45, %s46
      %p50 = pneg %p44
      %p51 = scmp.eq.s32.totalorder %s14, 1
      %p52 = por %p50, %p51
      %p53 = scmp.ne.s32.totalorder %s45, %s48
      %p54 = scmp.eq.s32.totalorder %s14, 0
      %p55 = por %p53, %p54
      %p56 = scmp.ne.s32.totalorder %s45, %s48
      %p57 = scmp.eq.s32.totalorder %s19, 1
      %p58 = por %p56, %p57
      %p59 = scmp.ne.s32.totalorder %s48, %s49
      %p60 = scmp.eq.s32.totalorder %s19, 0
      %p61 = por %p59, %p60
      %p62 = scmp.ne.s32.totalorder %s48, %s49
      %p63 = scmp.eq.s32.totalorder %s20, 1
      %p64 = por %p62, %p63
      %p66 = scmp.ne.s32.totalorder %s49, %s65
      %p67 = scmp.eq.s32.totalorder %s20, 0
      %p68 = por %p66, %p67
      %s70 = sadd.s32 %s69, 1
      %p73 = scmp.eq.s32.totalorder %s14, 1
      %p74 = scmp.ne.s32.totalorder %s69, %s71
      %p75 = scmp.eq.s32.totalorder %s14, 0
      %p76 = por %p74, %p75
      %p77 = scmp.ne.s32.totalorder %s69, %s71
      %p78 = scmp.eq.s32.totalorder %s19, 1
      %p79 = por %p77, %p78
      %p80 = scmp.ne.s32.totalorder %s71, %s72
      %p81 = scmp.eq.s32.totalorder %s19, 0
      %p82 = por %p80, %p81
      %p83 = scmp.ne.s32.totalorder %s71, %s72
      %p84 = scmp.eq.s32.totalorder %s20, 1
      %p85 = por %p83, %p84
      %p87 = scmp.ne.s32.totalorder %s72, %s86
      %p88 = scmp.eq.s32.totalorder %s20, 0
      %p89 = por %p87, %p88
      %s91 = sadd.s32 %s90, 1
      %p94 = scmp.eq.s32.totalorder %s14, 1
      %p95 = scmp.ne.s32.totalorder %s90, %s92
      %p96 = scmp.eq.s32.totalorder %s14, 0
      %p97 = por %p95, %p96
      %p98 = scmp.ne.s32.totalorder %s90, %s92
      %p99 = scmp.eq.s32.totalorder %s19, 1
      %p100 = por %p98, %p99
      %p101 = scmp.ne.s32.totalorder %s92, %s93
      %p102 = scmp.eq.s32.totalorder %s19, 0
      %p103 = por %p101, %p102
      %p104 = scmp.ne.s32.totalorder %s92, %s93
      %p105 = scmp.eq.s32.totalorder %s20, 1
      %p106 = por %p104, %p105
      %p108 = scmp.ne.s32.totalorder %s93, %s107
      %p109 = scmp.eq.s32.totalorder %s20, 0
      %p110 = por %p108, %p109
      %s112 = sadd.s32 %s111, 1
      %p115 = scmp.eq.s32.totalorder %s14, 1
      %p116 = scmp.ne.s32.totalorder %s111, %s113
      %p117 = scmp.eq.s32.totalorder %s14, 0
      %p118 = por %p116, %p117
      %p119 = scmp.ne.s32.totalorder %s111, %s113
      %p120 = scmp.eq.s32.totalorder %s19, 1
      %p121 = por %p119, %p120
      %p122 = scmp.ne.s32.totalorder %s113, %s114
      %p123 = scmp.eq.s32.totalorder %s19, 0
      %p124 = por %p122, %p123
      %p125 = scmp.ne.s32.totalorder %s113, %s114
      %p126 = scmp.eq.s32.totalorder %s20, 1
      %p127 = por %p125, %p126
      %p129 = scmp.ne.s32.totalorder %s114, %s128
      %p130 = scmp.eq.s32.totalorder %s20, 0
      %p131 = por %p129, %p130
      %s132 = ssub.s32 %s14, %s21
      %p133 = scmp.eq.s32.totalorder %s132, 0
      %s135 = sadd.s32 %s134, 1
      %s136 = scalar_select %p133, %s134, %s135
      %p139 = pneg %p133
      %p140 = scmp.eq.s32.totalorder %s14, 1
      %p141 = por %p139, %p140
      %p142 = scmp.ne.s32.totalorder %s134, %s137
      %p143 = scmp.eq.s32.totalorder %s14, 0
      %p144 = por %p142, %p143
      %p145 = scmp.ne.s32.totalorder %s134, %s137
      %p146 = scmp.eq.s32.totalorder %s19, 1
      %p147 = por %p145, %p146
      %p148 = scmp.ne.s32.totalorder %s137, %s138
      %p149 = scmp.eq.s32.totalorder %s19, 0
      %p150 = por %p148, %p149
      %p151 = scmp.ne.s32.totalorder %s137, %s138
      %p152 = scmp.eq.s32.totalorder %s20, 1
      %p153 = por %p151, %p152
      %p155 = scmp.ne.s32.totalorder %s138, %s154
      %p156 = scmp.eq.s32.totalorder %s20, 0
      %p157 = por %p155, %p156
      %s159 = sadd.s32 %s158, 1
      %p162 = scmp.eq.s32.totalorder %s14, 1
      %p163 = scmp.ne.s32.totalorder %s158, %s160
      %p164 = scmp.eq.s32.totalorder %s14, 0
      %p165 = por %p163, %p164
      %p166 = scmp.ne.s32.totalorder %s158, %s160
      %p167 = scmp.eq.s32.totalorder %s19, 1
      %p168 = por %p166, %p167
      %p169 = scmp.ne.s32.totalorder %s160, %s161
      %p170 = scmp.eq.s32.totalorder %s19, 0
      %p171 = por %p169, %p170
      %p172 = scmp.ne.s32.totalorder %s160, %s161
      %p173 = scmp.eq.s32.totalorder %s20, 1
      %p174 = por %p172, %p173
      %p176 = scmp.ne.s32.totalorder %s161, %s175
      %p177 = scmp.eq.s32.totalorder %s20, 0
      %p178 = por %p176, %p177
      %p179 = scmp.le.s32.totalorder 1, %s14
      %p180 = scmp.lt.s32.totalorder %s14, 3
      %p181 = pnand %p179, %p180
      %p182 = pneg %p181
      // Predicated region
      $region9: #{rnn_base_encoder_forward.1} parent=5 // pred_check
        _
      $region10: #{rnn_base_encoder_forward.1} parent=5 // pred_check_branch
        %184 = sbr.rel (%p181) target = $region12
      $region11: #{rnn_base_encoder_forward.1} parent=5 // pred_region
        %s185 = ssub.s32 %s14, 1
        // Predicated region
        $region13: #{rnn_base_encoder_forward.1} parent=11 // pred_check
          %p186 = pneg %p35
        $region14: #{rnn_base_encoder_forward.1} parent=11 // pred_check_branch
          %188 = sbr.rel (%p186) target = $region16
        $region15: #{rnn_base_encoder_forward.1} parent=11 // pred_region
          _
        $region16: #{rnn_base_encoder_forward.1} parent=11 // pred_fallthru
          _
        // Predicated region
        $region17: #{rnn_base_encoder_forward.1} parent=11 // pred_check
          %p189 = pneg %p82
        $region18: #{rnn_base_encoder_forward.1} parent=11 // pred_check_branch
          %191 = sbr.rel (%p189) target = $region20
        $region19: #{rnn_base_encoder_forward.1} parent=11 // pred_region
          _
        $region20: #{rnn_base_encoder_forward.1} parent=11 // pred_fallthru
          _
        // Predicated region
        $region21: #{rnn_base_encoder_forward.1} parent=11 // pred_check
          %p192 = pneg %p103
        $region22: #{rnn_base_encoder_forward.1} parent=11 // pred_check_branch
          %194 = sbr.rel (%p192) target = $region24
        $region23: #{rnn_base_encoder_forward.1} parent=11 // pred_region
          _
        $region24: #{rnn_base_encoder_forward.1} parent=11 // pred_fallthru
          _
        // Predicated region
        $region25: #{rnn_base_encoder_forward.1} parent=11 // pred_check
          %p195 = pneg %p124
        $region26: #{rnn_base_encoder_forward.1} parent=11 // pred_check_branch
          %197 = sbr.rel (%p195) target = $region28
        $region27: #{rnn_base_encoder_forward.1} parent=11 // pred_region
          _
        $region28: #{rnn_base_encoder_forward.1} parent=11 // pred_fallthru
          _
      $region12: #{rnn_base_encoder_forward.1} parent=5 // pred_fallthru
        _
      %p198 = scmp.lt.s32.totalorder %s14, 2
      // Predicated region
      $region29: #{rnn_base_encoder_forward.1} parent=5 // pred_check
        %p199 = pneg %p198
      $region30: #{rnn_base_encoder_forward.1} parent=5 // pred_check_branch
        %201 = sbr.rel (%p199) target = $region32
      $region31: #{rnn_base_encoder_forward.1} parent=5 // pred_region
        // Predicated region
        $region33: #{rnn_base_encoder_forward.1} parent=31 // pred_check
          %p202 = pneg %p55
        $region34: #{rnn_base_encoder_forward.1} parent=31 // pred_check_branch
          %204 = sbr.rel (%p202) target = $region36
        $region35: #{rnn_base_encoder_forward.1} parent=31 // pred_region
          %s205 = smul.u32 8, %s14
          %p206 = scmp.lt.s32.totalorder %s205, 15
          %s207 = scalar_select %p206, %s205, 15
          %s208 = smul.addr %s207, 4
          %s209 = scalar_lea.vmem %s1, %s208
          %s210 = smul.u32 8, %s14
        $region36: #{rnn_base_encoder_forward.1} parent=31 // pred_fallthru
          _
      $region32: #{rnn_base_encoder_forward.1} parent=5 // pred_fallthru
        _
      %p211 = scmp.le.s32.totalorder 1, %s14
      %p212 = scmp.lt.s32.totalorder %s14, 3
      %p213 = pnand %p211, %p212
      %p214 = pneg %p213
      // Predicated region
      $region37: #{rnn_base_encoder_forward.1} parent=5 // pred_check
        _
      $region38: #{rnn_base_encoder_forward.1} parent=5 // pred_check_branch
        %216 = sbr.rel (%p213) target = $region40
      $region39: #{rnn_base_encoder_forward.1} parent=5 // pred_region
        %s217 = ssub.s32 %s14, 1
        %p218 = pneg %p35
        %p219 = pneg %p32
        %s220 = smul.u32 8, %s19
        %p221 = scmp.lt.s32.totalorder %s220, 15
        %s222 = scalar_select %p221, %s220, 15
        %s223 = smul.addr %s222, 4
        %s224 = scalar_lea.vmem %s1, %s223
        %p225 = pneg %p61
        %p226 = pneg %p58
        %p227 = pneg %p82
        %p228 = pneg %p79
        %p229 = pneg %p103
        %p230 = pneg %p100
        %p231 = pneg %p124
        %p232 = pneg %p121
        %p233 = pneg %p150
        %p234 = pneg %p147
        %s235 = smul.u32 8, %s19
        %p236 = scmp.lt.s32.totalorder %s235, 15
        %s237 = scalar_select %p236, %s235, 15
        %s238 = smul.addr %s237, 8
        %s239 = scalar_lea.vmem %s5, %s238
        %p240 = pneg %p171
        %p241 = pneg %p168
        %s242 = smul.u32 8, %s19
        %p243 = scmp.lt.s32.totalorder %s242, 15
        %s244 = scalar_select %p243, %s242, 15
        %s245 = smul.addr %s244, 4
        %s246 = scalar_lea.vmem %s1, %s245
        %s247 = smul.u32 8, %s19
        %s248 = smul.u32 8, %s19
        %p249 = scmp.lt.s32.totalorder %s248, 15
        %s250 = scalar_select %p249, %s248, 15
        %s251 = smul.addr %s250, 8
        %s252 = scalar_lea.vmem %s5, %s251
        %s253 = smul.u32 8, %s19
        %p255 = scmp.eq.s32.totalorder %s19, 0
        // Predicated region
        $region41: #{rnn_base_encoder_forward.1} parent=39 // pred_check
          %p256 = pneg %p255
        $region42: #{rnn_base_encoder_forward.1} parent=39 // pred_check_branch
          %258 = sbr.rel (%p256) target = $region44
        $region43: #{rnn_base_encoder_forward.1} parent=39 // pred_region
          %vm259 = vcmask 261120
          %260 = vst.msk [vmem:[#allocation2] sm:$0xff] %vm259, 0.0
          %261 = vst.msk [vmem:[#allocation3] sm:$0xff] %vm259, 0.0
        $region44: #{rnn_base_encoder_forward.1} parent=39 // pred_fallthru
          _
        %v262 = vld [vmem:[%s246] sm:$0xf]
        %v263 = vld [vmem:[%s246 + $0x4] sm:$0xf]
        %v264 = vld [vmem:[%s246 + $0x8] sm:$0xf]
        %v265 = vld [vmem:[%s246 + $0xc] sm:$0xf]
        %v266 = vld [vmem:[%s246 + $0x10] sm:$0xf]
        %v267 = vld [vmem:[%s246 + $0x14] sm:$0xf]
        %v268 = vld [vmem:[%s246 + $0x18] sm:$0xf]
        %v269 = vld [vmem:[%s246 + $0x1c] sm:$0xf]
        %v270 = vld [vmem:[%s2] sm:$0xf]
        %v271 = vld [vmem:[%s2 + $0x4] sm:$0xf]
        %v272 = vld [vmem:[%s4] sm:$0x1]
        %v274 = vlaneseq
        %v275 = vshrl.u32 %v274, 7
        %v276 = vsub.s32 0, %v275
        %v277 = vrot.slane %v272, %v276
        %v287 = vunpack.c.l.b16 %v262
        %v288 = vunpack.c.l.b16 %v263
        %v289 = vunpack.c.l.b16 %v264
        %v290 = vunpack.c.l.b16 %v265
        %v291 = vunpack.c.l.b16 %v266
        %v292 = vunpack.c.l.b16 %v267
        %v293 = vunpack.c.l.b16 %v268
        %v294 = vunpack.c.l.b16 %v269
        %v295 = vpack.c.b16 %v288, %v287
        %v296 = vpack.c.b16 %v290, %v289
        %v297 = vpack.c.b16 %v292, %v291
        %v298 = vpack.c.b16 %v294, %v293
        %v301 = vunpack.c.l.b16 %v270
        %v302 = vunpack.c.l.b16 %v271
        %v303 = vpack.c.b16 %v302, %v301
        %vm305 = vcmask 130048
        %v307 = vsel %vm305, %v295, 0
        %v310 = vsel %vm305, %v296, 0
        %v313 = vsel %vm305, %v297, 0
        %v316 = vsel %vm305, %v298, 0
        %318 = vmatprep.subr.bf16.mxu0 0
        %319 = vmatpush1.bf16.msra.mxu0 %v303
        %320 = vmatprep.subr.bf16.mxu0 0
        %321 = vmatpush1.bf16.msra.mxu0 0
        %322 = vmatprep.subr.bf16.mxu0 0
        %323 = vmatpush1.bf16.msra.mxu0 0
        %324 = vmatprep.subr.bf16.mxu0 0
        %325 = vmatpush1.bf16.msra.mxu0 0
        %326 = vmatprep.subr.bf16.mxu0 0
        %327 = vmatpush1.bf16.msra.mxu0 0
        %328 = vmatprep.subr.bf16.mxu0 0
        %329 = vmatpush1.bf16.msra.mxu0 0
        %330 = vmatprep.subr.bf16.mxu0 0
        %331 = vmatpush1.bf16.msra.mxu0 0
        %332 = vmatprep.subr.bf16.mxu0 0
        %333 = vmatpush1.bf16.msra.mxu0 0
        %334 = vmatprep.subr.bf16.mxu0 0
        %335 = vmatpush1.bf16.msra.mxu0 0
        %336 = vmatprep.subr.bf16.mxu0 0
        %337 = vmatpush1.bf16.msra.mxu0 0
        %338 = vmatprep.subr.bf16.mxu0 0
        %339 = vmatpush1.bf16.msra.mxu0 0
        %340 = vmatprep.subr.bf16.mxu0 0
        %341 = vmatpush1.bf16.msra.mxu0 0
        %342 = vmatprep.subr.bf16.mxu0 0
        %343 = vmatpush1.bf16.msra.mxu0 0
        %344 = vmatprep.subr.bf16.mxu0 0
        %345 = vmatpush1.bf16.msra.mxu0 0
        %346 = vmatprep.subr.bf16.mxu0 0
        %347 = vmatpush1.bf16.msra.mxu0 0
        %348 = vmatprep.subr.bf16.mxu0 0
        %349 = vmatpush1.bf16.msra.mxu0 0
        %350 = vmatprep.mubr.bf16.mxu0 0
        %351 = vmatmul.mubr.bf16.gmra.mrb[0].mxu0 %v307
        %v352 = vpop.f32.mrb[0].mxu0
        %v353 = vadd.f32 %v277, %v352
        %v354 = vpop.f32.mrb[0].mxu0
        %v355 = vpop.f32.mrb[0].mxu0
        %v356 = vadd.f32 %v277, %v355
        %v357 = vpop.f32.mrb[0].mxu0
        %358 = vmatprep.mubr.bf16.mxu0 0
        %359 = vmatmul.mubr.bf16.gmra.mrb[0].mxu0 %v310
        %v360 = vpop.f32.mrb[0].mxu0
        %v361 = vadd.f32 %v277, %v360
        %v362 = vpop.f32.mrb[0].mxu0
        %v363 = vpop.f32.mrb[0].mxu0
        %v364 = vadd.f32 %v277, %v363
        %v365 = vpop.f32.mrb[0].mxu0
        %366 = vmatprep.mubr.bf16.mxu0 0
        %367 = vmatmul.mubr.bf16.gmra.mrb[0].mxu0 %v313
        %v368 = vpop.f32.mrb[0].mxu0
        %v369 = vadd.f32 %v277, %v368
        %v370 = vpop.f32.mrb[0].mxu0
        %v371 = vpop.f32.mrb[0].mxu0
        %v372 = vadd.f32 %v277, %v371
        %v373 = vpop.f32.mrb[0].mxu0
        %374 = vmatprep.mubr.bf16.mxu0 0
        %375 = vmatmul.mubr.bf16.gmra.mrb[0].mxu0 %v316
        %v376 = vpop.f32.mrb[0].mxu0
        %v377 = vadd.f32 %v277, %v376
        %v378 = vpop.f32.mrb[0].mxu0
        %v379 = vpop.f32.mrb[0].mxu0
        %v380 = vadd.f32 %v277, %v379
        %v381 = vpop.f32.mrb[0].mxu0
        %382 = vdwg.mxu0
        %383 = vst [vmem:[#allocation4] sm:$0xff] %v353
        %384 = vst [vmem:[#allocation4 + $0x8] sm:$0xff] %v356
        %385 = vst [vmem:[#allocation4 + $0x10] sm:$0xff] %v361
        %386 = vst [vmem:[#allocation4 + $0x18] sm:$0xff] %v364
        %387 = vst [vmem:[#allocation4 + $0x20] sm:$0xff] %v369
        %388 = vst [vmem:[#allocation4 + $0x28] sm:$0xff] %v372
        %389 = vst [vmem:[#allocation4 + $0x30] sm:$0xff] %v377
        %390 = vst [vmem:[#allocation4 + $0x38] sm:$0xff] %v380
        %v391 = vld [vmem:[%s3] sm:$0xf]
        %v392 = vld [vmem:[%s3 + $0x4] sm:$0xf]
        %v393 = vld [vmem:[%s3 + $0x8] sm:$0xf]
        %v394 = vld [vmem:[%s3 + $0xc] sm:$0xf]
        %v395 = vld [vmem:[%s0] sm:$0xff]
        %s396 = smul.u32 %s19, 8
        %v397 = vld [vmem:[#allocation2] sm:$0xff]
        %v398 = vld [vmem:[#allocation3] sm:$0xff]
        %v399 = vld [vmem:[#allocation4] sm:$0xff]
        %v400 = vpack.c.bf16 %v397, %v397
        %v405 = vunpack.c.l.b16 %v391
        %v406 = vunpack.c.l.b16 %v392
        %v407 = vunpack.c.l.b16 %v393
        %v408 = vunpack.c.l.b16 %v394
        %v409 = vpack.c.b16 %v406, %v405
        %v410 = vpack.c.b16 %v408, %v407
        %vm413 = vcmask 261120
        %v415 = vsel %vm413, %v400, 0
        %417 = vmatprep.subr.bf16.mxu0 0
        %418 = vmatpush1.bf16.msra.mxu0 %v409
        %419 = vmatprep.subr.bf16.mxu0 0
        %420 = vmatpush1.bf16.msra.mxu0 %v410
        %421 = vmatprep.subr.bf16.mxu0 0
        %422 = vmatpush1.bf16.msra.mxu0 0
        %423 = vmatprep.subr.bf16.mxu0 0
        %424 = vmatpush1.bf16.msra.mxu0 0
        %425 = vmatprep.subr.bf16.mxu0 0
        %426 = vmatpush1.bf16.msra.mxu0 0
        %427 = vmatprep.subr.bf16.mxu0 0
        %428 = vmatpush1.bf16.msra.mxu0 0
        %429 = vmatprep.subr.bf16.mxu0 0
        %430 = vmatpush1.bf16.msra.mxu0 0
        %431 = vmatprep.subr.bf16.mxu0 0
        %432 = vmatpush1.bf16.msra.mxu0 0
        %433 = vmatprep.subr.bf16.mxu0 0
        %434 = vmatpush1.bf16.msra.mxu0 0
        %435 = vmatprep.subr.bf16.mxu0 0
        %436 = vmatpush1.bf16.msra.mxu0 0
        %437 = vmatprep.subr.bf16.mxu0 0
        %438 = vmatpush1.bf16.msra.mxu0 0
        %439 = vmatprep.subr.bf16.mxu0 0
        %440 = vmatpush1.bf16.msra.mxu0 0
        %441 = vmatprep.subr.bf16.mxu0 0
        %442 = vmatpush1.bf16.msra.mxu0 0
        %443 = vmatprep.subr.bf16.mxu0 0
        %444 = vmatpush1.bf16.msra.mxu0 0
        %445 = vmatprep.subr.bf16.mxu0 0
        %446 = vmatpush1.bf16.msra.mxu0 0
        %447 = vmatprep.subr.bf16.mxu0 0
        %448 = vmatpush1.bf16.msra.mxu0 0
        %449 = vmatprep.mubr.bf16.mxu0 0
        %450 = vmatmul.mubr.bf16.gmra.mrb[0].mxu0 %v415
        %v451 = vpop.f32.mrb[0].mxu0
        %v452 = vadd.f32 0.0, %v451
        %v453 = vpop.f32.mrb[0].mxu0
        %v454 = vpop.f32.mrb[0].mxu0
        %v455 = vpop.f32.mrb[0].mxu0
        %456 = vdwg.mxu0
        %v457 = vadd.f32 %v399, %v452
        %v458 = vxor.u32 %v457, 2147483648
        %v459 = vmul.f32 %v458, 1.442695
        %v460 = vpow.pop %v459
        %v461 = vadd.f32 %v460, 1.0
        %v462 = vrcp.pop %v461
        %v463 = vmul.f32 1.0, %v462
        %v464 = vtanh.pop %v457
        %466 = vrot.lane.b32.xlu0 %v398, 32
        %v467 = vpop.permute.xlu0 %466
        %v469 = vmul.f32 %v463, %v467
        %471 = vrot.lane.b32.xlu0 %v464, 64
        %v472 = vpop.permute.xlu0 %471
        %v474 = vmul.f32 %v463, %v472
        %476 = vrot.lane.b32.xlu0 %v474, 32
        %v477 = vpop.permute.xlu0 %476
        %v479 = vadd.f32 %v469, %v477
        %v480 = vtanh.pop %v479
        %482 = vrot.lane.b32.xlu0 %v480, 64
        %v483 = vpop.permute.xlu0 %482
        %v485 = vmul.f32 %v463, %v483
        %v486 = vstv %s396
        %vm487 = vcmp.lt.s32.totalorder %v486, %v395
        %v488 = vsel %vm487, 1, 0
        %489 = vset.pattern.permute.xlu0 0
        %490 = vperm.xlu0 %489, %v488
        %v491 = vpop.permute.xlu0 %490
        %vm492 = vcmp.eq.s32.totalorder %v491, 1
        %v493 = vsel %vm492, %v479, %v467
        %495 = vrot.lane.b32.xlu0 %v397, 96
        %v496 = vpop.permute.xlu0 %495
        %v498 = vsel %vm492, %v485, %v496
        %v499 = vsel %vm492, %v485, 0.0
        %501 = vrot.lane.b32.xlu0 %v499, 32
        %v502 = vpop.permute.xlu0 %501
        %504 = vst.msk [vmem:[%s252] sm:$0xff] %vm413, %v502
        %s505 = scalar_lea.vmem [#allocation4], 8
        %v506 = vld [vmem:[%s505] sm:$0xff]
        %v507 = vpack.c.bf16 %v498, %v498
        %509 = vrot.lane.b32.xlu0 %v507, 32
        %v510 = vpop.permute.xlu0 %509
        %v512 = vsel %vm413, %v510, 0
        %514 = vmatprep.subr.bf16.mxu0 0
        %515 = vmatpush1.bf16.msra.mxu0 %v409
        %516 = vmatprep.subr.bf16.mxu0 0
        %517 = vmatpush1.bf16.msra.mxu0 %v410
        %518 = vmatprep.subr.bf16.mxu0 0
        %519 = vmatpush1.bf16.msra.mxu0 0
        %520 = vmatprep.subr.bf16.mxu0 0
        %521 = vmatpush1.bf16.msra.mxu0 0
        %522 = vmatprep.subr.bf16.mxu0 0
        %523 = vmatpush1.bf16.msra.mxu0 0
        %524 = vmatprep.subr.bf16.mxu0 0
        %525 = vmatpush1.bf16.msra.mxu0 0
        %526 = vmatprep.subr.bf16.mxu0 0
        %527 = vmatpush1.bf16.msra.mxu0 0
        %528 = vmatprep.subr.bf16.mxu0 0
        %529 = vmatpush1.bf16.msra.mxu0 0
        %530 = vmatprep.subr.bf16.mxu0 0
        %531 = vmatpush1.bf16.msra.mxu0 0
        %532 = vmatprep.subr.bf16.mxu0 0
        %533 = vmatpush1.bf16.msra.mxu0 0
        %534 = vmatprep.subr.bf16.mxu0 0
        %535 = vmatpush1.bf16.msra.mxu0 0
        %536 = vmatprep.subr.bf16.mxu0 0
        %537 = vmatpush1.bf16.msra.mxu0 0
        %538 = vmatprep.subr.bf16.mxu0 0
        %539 = vmatpush1.bf16.msra.mxu0 0
        %540 = vmatprep.subr.bf16.mxu0 0
        %541 = vmatpush1.bf16.msra.mxu0 0
        %542 = vmatprep.subr.bf16.mxu0 0
        %543 = vmatpush1.bf16.msra.mxu0 0
        %544 = vmatprep.subr.bf16.mxu0 0
        %545 = vmatpush1.bf16.msra.mxu0 0
        %546 = vmatprep.mubr.bf16.mxu0 0
        %547 = vmatmul.mubr.bf16.gmra.mrb[0].mxu0 %v512
        %v548 = vpop.f32.mrb[0].mxu0
        %v549 = vadd.f32 0.0, %v548
        %v550 = vpop.f32.mrb[0].mxu0
        %v551 = vpop.f32.mrb[0].mxu0
        %v552 = vpop.f32.mrb[0].mxu0
        %553 = vdwg.mxu0
        %v554 = vadd.f32 %v506, %v549
        %v555 = vxor.u32 %v554, 2147483648
        %v556 = vmul.f32 %v555, 1.442695
        %v557 = vpow.pop %v556
        %v558 = vadd.f32 %v557, 1.0
        %v559 = vrcp.pop %v558
        %v560 = vmul.f32 1.0, %v559
        %v561 = vtanh.pop %v554
        %v562 = vmul.f32 %v560, %v493
        %564 = vrot.lane.b32.xlu0 %v561, 64
        %v565 = vpop.permute.xlu0 %564
        %v567 = vmul.f32 %v560, %v565
        %569 = vrot.lane.b32.xlu0 %v567, 32
        %v570 = vpop.permute.xlu0 %569
        %v572 = vadd.f32 %v562, %v570
        %v573 = vtanh.pop %v572
        %575 = vrot.lane.b32.xlu0 %v573, 64
        %v576 = vpop.permute.xlu0 %575
        %v578 = vmul.f32 %v560, %v576
        %s579 = sadd.s32 %s396, 1
        %v580 = vstv %s579
        %vm581 = vcmp.lt.s32.totalorder %v580, %v395
        %v582 = vsel %vm581, 1, 0
        %583 = vset.pattern.permute.xlu0 0
        %584 = vperm.xlu0 %583, %v582
        %v585 = vpop.permute.xlu0 %584
        %vm586 = vcmp.eq.s32.totalorder %v585, 1
        %v587 = vsel %vm586, %v572, %v493
        %v588 = vsel %vm586, %v578, %v498
        %v589 = vsel %vm586, %v578, 0.0
        %591 = vrot.lane.b32.xlu0 %v589, 32
        %v592 = vpop.permute.xlu0 %591
        %s594 = scalar_lea.vmem %s252, 8
        %595 = vst.msk [vmem:[%s594] sm:$0xff] %vm413, %v592
        %s596 = scalar_lea.vmem [#allocation4], 16
        %v597 = vld [vmem:[%s596] sm:$0xff]
        %v598 = vpack.c.bf16 %v588, %v588
        %600 = vrot.lane.b32.xlu0 %v598, 32
        %v601 = vpop.permute.xlu0 %600
        %v603 = vsel %vm413, %v601, 0
        %605 = vmatprep.subr.bf16.mxu0 0
        %606 = vmatpush1.bf16.msra.mxu0 %v409
        %607 = vmatprep.subr.bf16.mxu0 0
        %608 = vmatpush1.bf16.msra.mxu0 %v410
        %609 = vmatprep.subr.bf16.mxu0 0
        %610 = vmatpush1.bf16.msra.mxu0 0
        %611 = vmatprep.subr.bf16.mxu0 0
        %612 = vmatpush1.bf16.msra.mxu0 0
        %613 = vmatprep.subr.bf16.mxu0 0
        %614 = vmatpush1.bf16.msra.mxu0 0
        %615 = vmatprep.subr.bf16.mxu0 0
        %616 = vmatpush1.bf16.msra.mxu0 0
        %617 = vmatprep.subr.bf16.mxu0 0
        %618 = vmatpush1.bf16.msra.mxu0 0
        %619 = vmatprep.subr.bf16.mxu0 0
        %620 = vmatpush1.bf16.msra.mxu0 0
        %621 = vmatprep.subr.bf16.mxu0 0
        %622 = vmatpush1.bf16.msra.mxu0 0
        %623 = vmatprep.subr.bf16.mxu0 0
        %624 = vmatpush1.bf16.msra.mxu0 0
        %625 = vmatprep.subr.bf16.mxu0 0
        %626 = vmatpush1.bf16.msra.mxu0 0
        %627 = vmatprep.subr.bf16.mxu0 0
        %628 = vmatpush1.bf16.msra.mxu0 0
        %629 = vmatprep.subr.bf16.mxu0 0
        %630 = vmatpush1.bf16.msra.mxu0 0
        %631 = vmatprep.subr.bf16.mxu0 0
        %632 = vmatpush1.bf16.msra.mxu0 0
        %633 = vmatprep.subr.bf16.mxu0 0
        %634 = vmatpush1.bf16.msra.mxu0 0
        %635 = vmatprep.subr.bf16.mxu0 0
        %636 = vmatpush1.bf16.msra.mxu0 0
        %637 = vmatprep.mubr.bf16.mxu0 0
        %638 = vmatmul.mubr.bf16.gmra.mrb[0].mxu0 %v603
        %v639 = vpop.f32.mrb[0].mxu0
        %v640 = vadd.f32 0.0, %v639
        %v641 = vpop.f32.mrb[0].mxu0
        %v642 = vpop.f32.mrb[0].mxu0
        %v643 = vpop.f32.mrb[0].mxu0
        %644 = vdwg.mxu0
        %v645 = vadd.f32 %v597, %v640
        %v646 = vxor.u32 %v645, 2147483648
        %v647 = vmul.f32 %v646, 1.442695
        %v648 = vpow.pop %v647
        %v649 = vadd.f32 %v648, 1.0
        %v650 = vrcp.pop %v649
        %v651 = vmul.f32 1.0, %v650
        %v652 = vtanh.pop %v645
        %v653 = vmul.f32 %v651, %v587
        %655 = vrot.lane.b32.xlu0 %v652, 64
        %v656 = vpop.permute.xlu0 %655
        %v658 = vmul.f32 %v651, %v656
        %660 = vrot.lane.b32.xlu0 %v658, 32
        %v661 = vpop.permute.xlu0 %660
        %v663 = vadd.f32 %v653, %v661
        %v664 = vtanh.pop %v663
        %666 = vrot.lane.b32.xlu0 %v664, 64
        %v667 = vpop.permute.xlu0 %666
        %v669 = vmul.f32 %v651, %v667
        %s670 = sadd.s32 %s396, 2
        %v671 = vstv %s670
        %vm672 = vcmp.lt.s32.totalorder %v671, %v395
        %v673 = vsel %vm672, 1, 0
        %674 = vset.pattern.permute.xlu0 0
        %675 = vperm.xlu0 %674, %v673
        %v676 = vpop.permute.xlu0 %675
        %vm677 = vcmp.eq.s32.totalorder %v676, 1
        %v678 = vsel %vm677, %v663, %v587
        %v679 = vsel %vm677, %v669, %v588
        %v680 = vsel %vm677, %v669, 0.0
        %682 = vrot.lane.b32.xlu0 %v680, 32
        %v683 = vpop.permute.xlu0 %682
        %s685 = scalar_lea.vmem %s252, 16
        %686 = vst.msk [vmem:[%s685] sm:$0xff] %vm413, %v683
        %s687 = scalar_lea.vmem [#allocation4], 24
        %v688 = vld [vmem:[%s687] sm:$0xff]
        %v689 = vpack.c.bf16 %v679, %v679
        %691 = vrot.lane.b32.xlu0 %v689, 32
        %v692 = vpop.permute.xlu0 %691
        %v694 = vsel %vm413, %v692, 0
        %696 = vmatprep.subr.bf16.mxu0 0
        %697 = vmatpush1.bf16.msra.mxu0 %v409
        %698 = vmatprep.subr.bf16.mxu0 0
        %699 = vmatpush1.bf16.msra.mxu0 %v410
        %700 = vmatprep.subr.bf16.mxu0 0
        %701 = vmatpush1.bf16.msra.mxu0 0
        %702 = vmatprep.subr.bf16.mxu0 0
        %703 = vmatpush1.bf16.msra.mxu0 0
        %704 = vmatprep.subr.bf16.mxu0 0
        %705 = vmatpush1.bf16.msra.mxu0 0
        %706 = vmatprep.subr.bf16.mxu0 0
        %707 = vmatpush1.bf16.msra.mxu0 0
        %708 = vmatprep.subr.bf16.mxu0 0
        %709 = vmatpush1.bf16.msra.mxu0 0
        %710 = vmatprep.subr.bf16.mxu0 0
        %711 = vmatpush1.bf16.msra.mxu0 0
        %712 = vmatprep.subr.bf16.mxu0 0
        %713 = vmatpush1.bf16.msra.mxu0 0
        %714 = vmatprep.subr.bf16.mxu0 0
        %715 = vmatpush1.bf16.msra.mxu0 0
        %716 = vmatprep.subr.bf16.mxu0 0
        %717 = vmatpush1.bf16.msra.mxu0 0
        %718 = vmatprep.subr.bf16.mxu0 0
        %719 = vmatpush1.bf16.msra.mxu0 0
        %720 = vmatprep.subr.bf16.mxu0 0
        %721 = vmatpush1.bf16.msra.mxu0 0
        %722 = vmatprep.subr.bf16.mxu0 0
        %723 = vmatpush1.bf16.msra.mxu0 0
        %724 = vmatprep.subr.bf16.mxu0 0
        %725 = vmatpush1.bf16.msra.mxu0 0
        %726 = vmatprep.subr.bf16.mxu0 0
        %727 = vmatpush1.bf16.msra.mxu0 0
        %728 = vmatprep.mubr.bf16.mxu0 0
        %729 = vmatmul.mubr.bf16.gmra.mrb[0].mxu0 %v694
        %v730 = vpop.f32.mrb[0].mxu0
        %v731 = vadd.f32 0.0, %v730
        %v732 = vpop.f32.mrb[0].mxu0
        %v733 = vpop.f32.mrb[0].mxu0
        %v734 = vpop.f32.mrb[0].mxu0
        %735 = vdwg.mxu0
        %v736 = vadd.f32 %v688, %v731
        %v737 = vxor.u32 %v736, 2147483648
        %v738 = vmul.f32 %v737, 1.442695
        %v739 = vpow.pop %v738
        %v740 = vadd.f32 %v739, 1.0
        %v741 = vrcp.pop %v740
        %v742 = vmul.f32 1.0, %v741
        %v743 = vtanh.pop %v736
        %v744 = vmul.f32 %v742, %v678
        %746 = vrot.lane.b32.xlu0 %v743, 64
        %v747 = vpop.permute.xlu0 %746
        %v749 = vmul.f32 %v742, %v747
        %751 = vrot.lane.b32.xlu0 %v749, 32
        %v752 = vpop.permute.xlu0 %751
        %v754 = vadd.f32 %v744, %v752
        %v755 = vtanh.pop %v754
        %757 = vrot.lane.b32.xlu0 %v755, 64
        %v758 = vpop.permute.xlu0 %757
        %v760 = vmul.f32 %v742, %v758
        %s761 = sadd.s32 %s396, 3
        %v762 = vstv %s761
        %vm763 = vcmp.lt.s32.totalorder %v762, %v395
        %v764 = vsel %vm763, 1, 0
        %765 = vset.pattern.permute.xlu0 0
        %766 = vperm.xlu0 %765, %v764
        %v767 = vpop.permute.xlu0 %766
        %vm768 = vcmp.eq.s32.totalorder %v767, 1
        %v769 = vsel %vm768, %v754, %v678
        %v770 = vsel %vm768, %v760, %v679
        %v771 = vsel %vm768, %v760, 0.0
        %773 = vrot.lane.b32.xlu0 %v771, 32
        %v774 = vpop.permute.xlu0 %773
        %s776 = scalar_lea.vmem %s252, 24
        %777 = vst.msk [vmem:[%s776] sm:$0xff] %vm413, %v774
        %s778 = scalar_lea.vmem [#allocation4], 32
        %v779 = vld [vmem:[%s778] sm:$0xff]
        %v780 = vpack.c.bf16 %v770, %v770
        %782 = vrot.lane.b32.xlu0 %v780, 32
        %v783 = vpop.permute.xlu0 %782
        %v785 = vsel %vm413, %v783, 0
        %787 = vmatprep.subr.bf16.mxu0 0
        %788 = vmatpush1.bf16.msra.mxu0 %v409
        %789 = vmatprep.subr.bf16.mxu0 0
        %790 = vmatpush1.bf16.msra.mxu0 %v410
        %791 = vmatprep.subr.bf16.mxu0 0
        %792 = vmatpush1.bf16.msra.mxu0 0
        %793 = vmatprep.subr.bf16.mxu0 0
        %794 = vmatpush1.bf16.msra.mxu0 0
        %795 = vmatprep.subr.bf16.mxu0 0
        %796 = vmatpush1.bf16.msra.mxu0 0
        %797 = vmatprep.subr.bf16.mxu0 0
        %798 = vmatpush1.bf16.msra.mxu0 0
        %799 = vmatprep.subr.bf16.mxu0 0
        %800 = vmatpush1.bf16.msra.mxu0 0
        %801 = vmatprep.subr.bf16.mxu0 0
        %802 = vmatpush1.bf16.msra.mxu0 0
        %803 = vmatprep.subr.bf16.mxu0 0
        %804 = vmatpush1.bf16.msra.mxu0 0
        %805 = vmatprep.subr.bf16.mxu0 0
        %806 = vmatpush1.bf16.msra.mxu0 0
        %807 = vmatprep.subr.bf16.mxu0 0
        %808 = vmatpush1.bf16.msra.mxu0 0
        %809 = vmatprep.subr.bf16.mxu0 0
        %810 = vmatpush1.bf16.msra.mxu0 0
        %811 = vmatprep.subr.bf16.mxu0 0
        %812 = vmatpush1.bf16.msra.mxu0 0
        %813 = vmatprep.subr.bf16.mxu0 0
        %814 = vmatpush1.bf16.msra.mxu0 0
        %815 = vmatprep.subr.bf16.mxu0 0
        %816 = vmatpush1.bf16.msra.mxu0 0
        %817 = vmatprep.subr.bf16.mxu0 0
        %818 = vmatpush1.bf16.msra.mxu0 0
        %819 = vmatprep.mubr.bf16.mxu0 0
        %820 = vmatmul.mubr.bf16.gmra.mrb[0].mxu0 %v785
        %v821 = vpop.f32.mrb[0].mxu0
        %v822 = vadd.f32 0.0, %v821
        %v823 = vpop.f32.mrb[0].mxu0
        %v824 = vpop.f32.mrb[0].mxu0
        %v825 = vpop.f32.mrb[0].mxu0
        %826 = vdwg.mxu0
        %v827 = vadd.f32 %v779, %v822
        %v828 = vxor.u32 %v827, 2147483648
        %v829 = vmul.f32 %v828, 1.442695
        %v830 = vpow.pop %v829
        %v831 = vadd.f32 %v830, 1.0
        %v832 = vrcp.pop %v831
        %v833 = vmul.f32 1.0, %v832
        %v834 = vtanh.pop %v827
        %v835 = vmul.f32 %v833, %v769
        %837 = vrot.lane.b32.xlu0 %v834, 64
        %v838 = vpop.permute.xlu0 %837
        %v840 = vmul.f32 %v833, %v838
        %842 = vrot.lane.b32.xlu0 %v840, 32
        %v843 = vpop.permute.xlu0 %842
        %v845 = vadd.f32 %v835, %v843
        %v846 = vtanh.pop %v845
        %848 = vrot.lane.b32.xlu0 %v846, 64
        %v849 = vpop.permute.xlu0 %848
        %v851 = vmul.f32 %v833, %v849
        %s852 = sadd.s32 %s396, 4
        %v853 = vstv %s852
        %vm854 = vcmp.lt.s32.totalorder %v853, %v395
        %v855 = vsel %vm854, 1, 0
        %856 = vset.pattern.permute.xlu0 0
        %857 = vperm.xlu0 %856, %v855
        %v858 = vpop.permute.xlu0 %857
        %vm859 = vcmp.eq.s32.totalorder %v858, 1
        %v860 = vsel %vm859, %v845, %v769
        %v861 = vsel %vm859, %v851, %v770
        %v862 = vsel %vm859, %v851, 0.0
        %864 = vrot.lane.b32.xlu0 %v862, 32
        %v865 = vpop.permute.xlu0 %864
        %s867 = scalar_lea.vmem %s252, 32
        %868 = vst.msk [vmem:[%s867] sm:$0xff] %vm413, %v865
        %s869 = scalar_lea.vmem [#allocation4], 40
        %v870 = vld [vmem:[%s869] sm:$0xff]
        %v871 = vpack.c.bf16 %v861, %v861
        %873 = vrot.lane.b32.xlu0 %v871, 32
        %v874 = vpop.permute.xlu0 %873
        %v876 = vsel %vm413, %v874, 0
        %878 = vmatprep.subr.bf16.mxu0 0
        %879 = vmatpush1.bf16.msra.mxu0 %v409
        %880 = vmatprep.subr.bf16.mxu0 0
        %881 = vmatpush1.bf16.msra.mxu0 %v410
        %882 = vmatprep.subr.bf16.mxu0 0
        %883 = vmatpush1.bf16.msra.mxu0 0
        %884 = vmatprep.subr.bf16.mxu0 0
        %885 = vmatpush1.bf16.msra.mxu0 0
        %886 = vmatprep.subr.bf16.mxu0 0
        %887 = vmatpush1.bf16.msra.mxu0 0
        %888 = vmatprep.subr.bf16.mxu0 0
        %889 = vmatpush1.bf16.msra.mxu0 0
        %890 = vmatprep.subr.bf16.mxu0 0
        %891 = vmatpush1.bf16.msra.mxu0 0
        %892 = vmatprep.subr.bf16.mxu0 0
        %893 = vmatpush1.bf16.msra.mxu0 0
        %894 = vmatprep.subr.bf16.mxu0 0
        %895 = vmatpush1.bf16.msra.mxu0 0
        %896 = vmatprep.subr.bf16.mxu0 0
        %897 = vmatpush1.bf16.msra.mxu0 0
        %898 = vmatprep.subr.bf16.mxu0 0
        %899 = vmatpush1.bf16.msra.mxu0 0
        %900 = vmatprep.subr.bf16.mxu0 0
        %901 = vmatpush1.bf16.msra.mxu0 0
        %902 = vmatprep.subr.bf16.mxu0 0
        %903 = vmatpush1.bf16.msra.mxu0 0
        %904 = vmatprep.subr.bf16.mxu0 0
        %905 = vmatpush1.bf16.msra.mxu0 0
        %906 = vmatprep.subr.bf16.mxu0 0
        %907 = vmatpush1.bf16.msra.mxu0 0
        %908 = vmatprep.subr.bf16.mxu0 0
        %909 = vmatpush1.bf16.msra.mxu0 0
        %910 = vmatprep.mubr.bf16.mxu0 0
        %911 = vmatmul.mubr.bf16.gmra.mrb[0].mxu0 %v876
        %v912 = vpop.f32.mrb[0].mxu0
        %v913 = vadd.f32 0.0, %v912
        %v914 = vpop.f32.mrb[0].mxu0
        %v915 = vpop.f32.mrb[0].mxu0
        %v916 = vpop.f32.mrb[0].mxu0
        %917 = vdwg.mxu0
        %v918 = vadd.f32 %v870, %v913
        %v919 = vxor.u32 %v918, 2147483648
        %v920 = vmul.f32 %v919, 1.442695
        %v921 = vpow.pop %v920
        %v922 = vadd.f32 %v921, 1.0
        %v923 = vrcp.pop %v922
        %v924 = vmul.f32 1.0, %v923
        %v925 = vtanh.pop %v918
        %v926 = vmul.f32 %v924, %v860
        %928 = vrot.lane.b32.xlu0 %v925, 64
        %v929 = vpop.permute.xlu0 %928
        %v931 = vmul.f32 %v924, %v929
        %933 = vrot.lane.b32.xlu0 %v931, 32
        %v934 = vpop.permute.xlu0 %933
        %v936 = vadd.f32 %v926, %v934
        %v937 = vtanh.pop %v936
        %939 = vrot.lane.b32.xlu0 %v937, 64
        %v940 = vpop.permute.xlu0 %939
        %v942 = vmul.f32 %v924, %v940
        %s943 = sadd.s32 %s396, 5
        %v944 = vstv %s943
        %vm945 = vcmp.lt.s32.totalorder %v944, %v395
        %v946 = vsel %vm945, 1, 0
        %947 = vset.pattern.permute.xlu0 0
        %948 = vperm.xlu0 %947, %v946
        %v949 = vpop.permute.xlu0 %948
        %vm950 = vcmp.eq.s32.totalorder %v949, 1
        %v951 = vsel %vm950, %v936, %v860
        %v952 = vsel %vm950, %v942, %v861
        %v953 = vsel %vm950, %v942, 0.0
        %955 = vrot.lane.b32.xlu0 %v953, 32
        %v956 = vpop.permute.xlu0 %955
        %s958 = scalar_lea.vmem %s252, 40
        %959 = vst.msk [vmem:[%s958] sm:$0xff] %vm413, %v956
        %s960 = scalar_lea.vmem [#allocation4], 48
        %v961 = vld [vmem:[%s960] sm:$0xff]
        %v962 = vpack.c.bf16 %v952, %v952
        %964 = vrot.lane.b32.xlu0 %v962, 32
        %v965 = vpop.permute.xlu0 %964
        %v967 = vsel %vm413, %v965, 0
        %969 = vmatprep.subr.bf16.mxu0 0
        %970 = vmatpush1.bf16.msra.mxu0 %v409
        %971 = vmatprep.subr.bf16.mxu0 0
        %972 = vmatpush1.bf16.msra.mxu0 %v410
        %973 = vmatprep.subr.bf16.mxu0 0
        %974 = vmatpush1.bf16.msra.mxu0 0
        %975 = vmatprep.subr.bf16.mxu0 0
        %976 = vmatpush1.bf16.msra.mxu0 0
        %977 = vmatprep.subr.bf16.mxu0 0
        %978 = vmatpush1.bf16.msra.mxu0 0
        %979 = vmatprep.subr.bf16.mxu0 0
        %980 = vmatpush1.bf16.msra.mxu0 0
        %981 = vmatprep.subr.bf16.mxu0 0
        %982 = vmatpush1.bf16.msra.mxu0 0
        %983 = vmatprep.subr.bf16.mxu0 0
        %984 = vmatpush1.bf16.msra.mxu0 0
        %985 = vmatprep.subr.bf16.mxu0 0
        %986 = vmatpush1.bf16.msra.mxu0 0
        %987 = vmatprep.subr.bf16.mxu0 0
        %988 = vmatpush1.bf16.msra.mxu0 0
        %989 = vmatprep.subr.bf16.mxu0 0
        %990 = vmatpush1.bf16.msra.mxu0 0
        %991 = vmatprep.subr.bf16.mxu0 0
        %992 = vmatpush1.bf16.msra.mxu0 0
        %993 = vmatprep.subr.bf16.mxu0 0
        %994 = vmatpush1.bf16.msra.mxu0 0
        %995 = vmatprep.subr.bf16.mxu0 0
        %996 = vmatpush1.bf16.msra.mxu0 0
        %997 = vmatprep.subr.bf16.mxu0 0
        %998 = vmatpush1.bf16.msra.mxu0 0
        %999 = vmatprep.subr.bf16.mxu0 0
        %1000 = vmatpush1.bf16.msra.mxu0 0
        %1001 = vmatprep.mubr.bf16.mxu0 0
        %1002 = vmatmul.mubr.bf16.gmra.mrb[0].mxu0 %v967
        %v1003 = vpop.f32.mrb[0].mxu0
        %v1004 = vadd.f32 0.0, %v1003
        %v1005 = vpop.f32.mrb[0].mxu0
        %v1006 = vpop.f32.mrb[0].mxu0
        %v1007 = vpop.f32.mrb[0].mxu0
        %1008 = vdwg.mxu0
        %v1009 = vadd.f32 %v961, %v1004
        %v1010 = vxor.u32 %v1009, 2147483648
        %v1011 = vmul.f32 %v1010, 1.442695
        %v1012 = vpow.pop %v1011
        %v1013 = vadd.f32 %v1012, 1.0
        %v1014 = vrcp.pop %v1013
        %v1015 = vmul.f32 1.0, %v1014
        %v1016 = vtanh.pop %v1009
        %v1017 = vmul.f32 %v1015, %v951
        %1019 = vrot.lane.b32.xlu0 %v1016, 64
        %v1020 = vpop.permute.xlu0 %1019
        %v1022 = vmul.f32 %v1015, %v1020
        %1024 = vrot.lane.b32.xlu0 %v1022, 32
        %v1025 = vpop.permute.xlu0 %1024
        %v1027 = vadd.f32 %v1017, %v1025
        %v1028 = vtanh.pop %v1027
        %1030 = vrot.lane.b32.xlu0 %v1028, 64
        %v1031 = vpop.permute.xlu0 %1030
        %v1033 = vmul.f32 %v1015, %v1031
        %s1034 = sadd.s32 %s396, 6
        %v1035 = vstv %s1034
        %vm1036 = vcmp.lt.s32.totalorder %v1035, %v395
        %v1037 = vsel %vm1036, 1, 0
        %1038 = vset.pattern.permute.xlu0 0
        %1039 = vperm.xlu0 %1038, %v1037
        %v1040 = vpop.permute.xlu0 %1039
        %vm1041 = vcmp.eq.s32.totalorder %v1040, 1
        %v1042 = vsel %vm1041, %v1027, %v951
        %v1043 = vsel %vm1041, %v1033, %v952
        %v1044 = vsel %vm1041, %v1033, 0.0
        %1046 = vrot.lane.b32.xlu0 %v1044, 32
        %v1047 = vpop.permute.xlu0 %1046
        %s1049 = scalar_lea.vmem %s252, 48
        %1050 = vst.msk [vmem:[%s1049] sm:$0xff] %vm413, %v1047
        %s1051 = scalar_lea.vmem [#allocation4], 56
        %v1052 = vld [vmem:[%s1051] sm:$0xff]
        %v1053 = vpack.c.bf16 %v1043, %v1043
        %1055 = vrot.lane.b32.xlu0 %v1053, 32
        %v1056 = vpop.permute.xlu0 %1055
        %v1058 = vsel %vm413, %v1056, 0
        %1060 = vmatprep.subr.bf16.mxu0 0
        %1061 = vmatpush1.bf16.msra.mxu0 %v409
        %1062 = vmatprep.subr.bf16.mxu0 0
        %1063 = vmatpush1.bf16.msra.mxu0 %v410
        %1064 = vmatprep.subr.bf16.mxu0 0
        %1065 = vmatpush1.bf16.msra.mxu0 0
        %1066 = vmatprep.subr.bf16.mxu0 0
        %1067 = vmatpush1.bf16.msra.mxu0 0
        %1068 = vmatprep.subr.bf16.mxu0 0
        %1069 = vmatpush1.bf16.msra.mxu0 0
        %1070 = vmatprep.subr.bf16.mxu0 0
        %1071 = vmatpush1.bf16.msra.mxu0 0
        %1072 = vmatprep.subr.bf16.mxu0 0
        %1073 = vmatpush1.bf16.msra.mxu0 0
        %1074 = vmatprep.subr.bf16.mxu0 0
        %1075 = vmatpush1.bf16.msra.mxu0 0
        %1076 = vmatprep.subr.bf16.mxu0 0
        %1077 = vmatpush1.bf16.msra.mxu0 0
        %1078 = vmatprep.subr.bf16.mxu0 0
        %1079 = vmatpush1.bf16.msra.mxu0 0
        %1080 = vmatprep.subr.bf16.mxu0 0
        %1081 = vmatpush1.bf16.msra.mxu0 0
        %1082 = vmatprep.subr.bf16.mxu0 0
        %1083 = vmatpush1.bf16.msra.mxu0 0
        %1084 = vmatprep.subr.bf16.mxu0 0
        %1085 = vmatpush1.bf16.msra.mxu0 0
        %1086 = vmatprep.subr.bf16.mxu0 0
        %1087 = vmatpush1.bf16.msra.mxu0 0
        %1088 = vmatprep.subr.bf16.mxu0 0
        %1089 = vmatpush1.bf16.msra.mxu0 0
        %1090 = vmatprep.subr.bf16.mxu0 0
        %1091 = vmatpush1.bf16.msra.mxu0 0
        %1092 = vmatprep.mubr.bf16.mxu0 0
        %1093 = vmatmul.mubr.bf16.gmra.mrb[0].mxu0 %v1058
        %v1094 = vpop.f32.mrb[0].mxu0
        %v1095 = vadd.f32 0.0, %v1094
        %v1096 = vpop.f32.mrb[0].mxu0
        %v1097 = vpop.f32.mrb[0].mxu0
        %v1098 = vpop.f32.mrb[0].mxu0
        %1099 = vdwg.mxu0
        %v1100 = vadd.f32 %v1052, %v1095
        %v1101 = vxor.u32 %v1100, 2147483648
        %v1102 = vmul.f32 %v1101, 1.442695
        %v1103 = vpow.pop %v1102
        %v1104 = vadd.f32 %v1103, 1.0
        %v1105 = vrcp.pop %v1104
        %v1106 = vmul.f32 1.0, %v1105
        %v1107 = vtanh.pop %v1100
        %v1108 = vmul.f32 %v1106, %v1042
        %1110 = vrot.lane.b32.xlu0 %v1107, 64
        %v1111 = vpop.permute.xlu0 %1110
        %v1113 = vmul.f32 %v1106, %v1111
        %1115 = vrot.lane.b32.xlu0 %v1113, 32
        %v1116 = vpop.permute.xlu0 %1115
        %v1118 = vadd.f32 %v1108, %v1116
        %v1119 = vtanh.pop %v1118
        %1121 = vrot.lane.b32.xlu0 %v1119, 64
        %v1122 = vpop.permute.xlu0 %1121
        %v1124 = vmul.f32 %v1106, %v1122
        %s1125 = sadd.s32 %s396, 7
        %v1126 = vstv %s1125
        %vm1127 = vcmp.lt.s32.totalorder %v1126, %v395
        %v1128 = vsel %vm1127, 1, 0
        %1129 = vset.pattern.permute.xlu0 0
        %1130 = vperm.xlu0 %1129, %v1128
        %v1131 = vpop.permute.xlu0 %1130
        %vm1132 = vcmp.eq.s32.totalorder %v1131, 1
        %v1133 = vsel %vm1132, %v1118, %v1042
        %v1134 = vsel %vm1132, %v1124, %v1043
        %v1135 = vsel %vm1132, %v1124, 0.0
        %1137 = vrot.lane.b32.xlu0 %v1135, 32
        %v1138 = vpop.permute.xlu0 %1137
        %s1140 = scalar_lea.vmem %s252, 56
        %1141 = vst.msk [vmem:[%s1140] sm:$0xff] %vm413, %v1138
        %1143 = vrot.lane.b32.xlu0 %v1134, 32
        %v1144 = vpop.permute.xlu0 %1143
        %1146 = vst.msk [vmem:[#allocation2] sm:$0xff] %vm413, %v1144
        %1148 = vrot.lane.b32.xlu0 %v1133, 96
        %v1149 = vpop.permute.xlu0 %1148
        %1151 = vst.msk [vmem:[#allocation3] sm:$0xff] %vm413, %v1149
        %1152 = vst.msk [vmem:[#allocation5] sm:$0xff] %vm413, %v1144
        %s1153 = smul.u32 8, %s19
        %p1154 = scmp.lt.s32.totalorder %s1153, 15
        %s1155 = scalar_select %p1154, %s1153, 15
        %s1156 = smul.addr %s1155, 8
        %s1157 = scalar_lea.vmem %s5, %s1156
        // Predicated region
        $region45: #{rnn_base_encoder_forward.1} parent=39 // pred_check
          %p1158 = pneg %p147
        $region46: #{rnn_base_encoder_forward.1} parent=39 // pred_check_branch
          %1160 = sbr.rel (%p1158) target = $region48
        $region47: #{rnn_base_encoder_forward.1} parent=39 // pred_region
          %s1161 = smul.u32 8, %s19
        $region48: #{rnn_base_encoder_forward.1} parent=39 // pred_fallthru
          _
        // Predicated region
        $region49: #{rnn_base_encoder_forward.1} parent=39 // pred_check
          %p1162 = pneg %p168
        $region50: #{rnn_base_encoder_forward.1} parent=39 // pred_check_branch
          %1164 = sbr.rel (%p1162) target = $region52
        $region51: #{rnn_base_encoder_forward.1} parent=39 // pred_region
          %s1166 = ssub.s32 128, 128
          %1167 = vsyncadd [#allocation6], %s1166
          %s1169 = sshll.u32 [#allocation5], 4
          %s1170 = int_to_ptr.vmem [resolvable:$true] %s1169
          %1172 = dma.vmem_to_hbm [thread:$0]  %s1170, 128, %s6, [#allocation6]
        $region52: #{rnn_base_encoder_forward.1} parent=39 // pred_fallthru
          _
        // Predicated region
        $region53: #{rnn_base_encoder_forward.1} parent=39 // pred_check
          %p1173 = pneg %p168
        $region54: #{rnn_base_encoder_forward.1} parent=39 // pred_check_branch
          %1175 = sbr.rel (%p1173) target = $region56
        $region55: #{rnn_base_encoder_forward.1} parent=39 // pred_region
          %1176 = dma.done [#allocation6], 128
        $region56: #{rnn_base_encoder_forward.1} parent=39 // pred_fallthru
          _
      $region40: #{rnn_base_encoder_forward.1} parent=5 // pred_fallthru
        _
      %p1177 = scmp.le.s32.totalorder 2, %s14
      // Predicated region
      $region57: #{rnn_base_encoder_forward.1} parent=5 // pred_check
        %p1178 = pneg %p1177
      $region58: #{rnn_base_encoder_forward.1} parent=5 // pred_check_branch
        %1180 = sbr.rel (%p1178) target = $region60
      $region59: #{rnn_base_encoder_forward.1} parent=5 // pred_region
        %s1181 = ssub.s32 %s14, 2
        // Predicated region
        $region61: #{rnn_base_encoder_forward.1} parent=59 // pred_check
          %p1182 = pneg %p153
        $region62: #{rnn_base_encoder_forward.1} parent=59 // pred_check_branch
          %1184 = sbr.rel (%p1182) target = $region64
        $region63: #{rnn_base_encoder_forward.1} parent=59 // pred_region
          %s1185 = smul.u32 8, %s20
          %p1186 = scmp.lt.s32.totalorder %s1185, 15
          %s1187 = scalar_select %p1186, %s1185, 15
          %s1188 = smul.addr %s1187, 8
          %s1189 = scalar_lea.vmem %s5, %s1188
        $region64: #{rnn_base_encoder_forward.1} parent=59 // pred_fallthru
          _
      $region60: #{rnn_base_encoder_forward.1} parent=5 // pred_fallthru
        _
    $region6: #{rnn_base_encoder_forward.1} parent=1 // loop_footer
      %s18 = sadd.s32 1, %s14
    $region7: #{rnn_base_encoder_forward.1} parent=1 // loop_footer_branch
      %13 = sbr.rel target = $region3
    $region8: #{rnn_base_encoder_forward.1} parent=1 // loop_exit
      _
    %1190 = vsyncpa [#allocation6], 1
    %s1191 = scalar_lea.sflag [#allocation6], 1
    %1192 = vsyncpa %s1191, 1

</llo_original>
